<compile_context>
chip_gen: v7x
topology: tpu7x:2x2x1
jax: 0.10.0
libtpu: 0.0.40
codegen_flags: <defaults>
</compile_context>

<pallas_src>
import functools

import jax
import jax.numpy as jnp
from jax.experimental import pallas as pl
from jax.experimental.pallas import tpu as pltpu


NEG_SLOPE = 0.2
LANE = 128


def _round_up(x, m):
    return ((x + m - 1) // m) * m


def _leaky_relu(x, neg_slope):
    return jnp.where(x > 0, x, neg_slope * x)


def _discriminator_kernel(z_ref,
                          w1_ref, b1_ref,
                          w2_ref, b2_ref,
                          w3_ref, b3_ref,
                          w4_ref, b4_ref,
                          w5_ref, b5_ref,
                          w6_ref, b6_ref,
                          out_ref,
                          *, neg_slope):
    """Fused 6-layer MLP: 5x (bf16 matmul + f32 bias + LeakyReLU) + final matmul."""
    h = z_ref[...]  # (TB, Kpad) float32

    def layer(h, w_ref, b_ref, act):
        # bf16 operands on the MXU, f32 accumulation.
        y = jnp.dot(h.astype(jnp.bfloat16), w_ref[...],
                    preferred_element_type=jnp.float32)
        y = y + b_ref[...]                 # (1, Npad) f32 broadcast over batch
        if act:
            y = _leaky_relu(y, neg_slope)
        return y

    h = layer(h, w1_ref, b1_ref, act=True)
    h = layer(h, w2_ref, b2_ref, act=True)
    h = layer(h, w3_ref, b3_ref, act=True)
    h = layer(h, w4_ref, b4_ref, act=True)
    h = layer(h, w5_ref, b5_ref, act=True)
    h = layer(h, w6_ref, b6_ref, act=False)

    out_ref[...] = h.astype(out_ref.dtype)


def discriminator_forward(z, params, *, neg_slope=NEG_SLOPE, block_batch=256):
    """z: (B, latent_dim) float32.  params: list of 6 (W[in,out], b[out]) pairs."""
    B, latent_dim = z.shape
    out_units = params[-1][0].shape[1]

    # ---- batch tiling -------------------------------------------------------
    tb = min(block_batch, _round_up(B, 8))       # >= 8 sublanes per block
    b_pad = _round_up(B, tb)

    # ---- pad + cast parameters (zero padding is exact, see header comment) --
    k_pad0 = _round_up(latent_dim, LANE)
    padded = []
    for w, b in params:
        fan_in, fan_out = w.shape
        kp = _round_up(fan_in, LANE)
        np_ = _round_up(fan_out, LANE)
        w_p = jnp.zeros((kp, np_), jnp.bfloat16)
        w_p = w_p.at[:fan_in, :fan_out].set(w.astype(jnp.bfloat16))
        b_p = jnp.zeros((1, np_), jnp.float32)
        b_p = b_p.at[:, :fan_out].set(b.astype(jnp.float32))
        padded.append((w_p, b_p))
    out_pad = padded[-1][0].shape[1]

    z_p = jnp.zeros((b_pad, k_pad0), jnp.float32)
    z_p = z_p.at[:B, :latent_dim].set(z.astype(jnp.float32))

    flat_args = [z_p]
    for w_p, b_p in padded:
        flat_args.append(w_p)
        flat_args.append(b_p)

    # ---- BlockSpecs ---------------------------------------------------------
    # z/out are tiled over the batch grid; weights/biases use a constant block
    # index so Pallas keeps them resident in VMEM across all grid steps.
    in_specs = [pl.BlockSpec((tb, k_pad0), lambda i: (i, 0))]
    for w_p, b_p in padded:
        in_specs.append(pl.BlockSpec(w_p.shape, lambda i: (0, 0)))
        in_specs.append(pl.BlockSpec(b_p.shape, lambda i: (0, 0)))
    out_spec = pl.BlockSpec((tb, out_pad), lambda i: (i, 0))

    # ---- VMEM budget: actual footprint + headroom, capped below v7x physical.
    def nbytes(a):
        return a.size * a.dtype.itemsize

    param_bytes = sum(nbytes(w_p) + nbytes(b_p) for w_p, b_p in padded)
    io_bytes = tb * k_pad0 * 4 + tb * out_pad * 4
    max_hidden = max(w_p.shape[1] for w_p, _ in padded)
    act_bytes = tb * max_hidden * 6              # f32 activation + bf16 copy
    vmem_limit = 2 * param_bytes + 4 * io_bytes + 2 * act_bytes + (8 << 20)
    vmem_limit = int(min(vmem_limit, 48 << 20))

    kernel = functools.partial(_discriminator_kernel, neg_slope=neg_slope)

    out = pl.pallas_call(
        kernel,
        out_shape=jax.ShapeDtypeStruct((b_pad, out_pad), jnp.float32),
        grid=(b_pad // tb,),
        in_specs=in_specs,
        out_specs=out_spec,
        compiler_params=pltpu.CompilerParams(
            dimension_semantics=("parallel",),
            vmem_limit_bytes=vmem_limit),
    )(*flat_args)

    return out[:B, :out_units]


def init_discriminator_params(key, latent_dim=10, hidden_units=1000,
                              out_units=2, dtype=jnp.float32):
    """Init mimicking the PyTorch module's reset_parameters:
       weights ~ kaiming_uniform (relu), biases ~ U(-1/sqrt(fan_in), 1/sqrt(fan_in)).
       Weights stored as (in_features, out_features)."""
    dims = ([latent_dim] + [hidden_units] * 5, [hidden_units] * 5 + [out_units])
    params = []
    for fan_in, fan_out in zip(*dims):
        key, kw, kb = jax.random.split(key, 3)
        w_bound = jnp.sqrt(2.0) * jnp.sqrt(3.0 / fan_in)
        w = jax.random.uniform(kw, (fan_in, fan_out), dtype, -w_bound, w_bound)
        b_bound = 1.0 / jnp.sqrt(fan_in)
        b = jax.random.uniform(kb, (fan_out,), dtype, -b_bound, b_bound)
        params.append((w, b))
    return params


def _reference_forward(z, params, neg_slope=NEG_SLOPE):
    """Plain-JAX reference mirroring the kernel's bf16 matmul / f32 accumulate."""
    h = z.astype(jnp.float32)
    n = len(params)
    for i, (w, b) in enumerate(params):
        h = jnp.dot(h.astype(jnp.bfloat16), w.astype(jnp.bfloat16),
                    preferred_element_type=jnp.float32) + b.astype(jnp.float32)
        if i < n - 1:
            h = jnp.where(h > 0, h, neg_slope * h)
    return h


if __name__ == "__main__":
    # Small shapes consistent with the module's forward: z is (batch, latent_dim).
    batch = 8
    latent_dim = 10
    hidden_units = 256  # scaled-down stand-in for 1000
    out_units = 2

    key = jax.random.PRNGKey(0)
    key_z, key_p = jax.random.split(key)
    z = jax.random.normal(key_z, (batch, latent_dim), dtype=jnp.float32)
    params = init_discriminator_params(
        key_p, latent_dim=latent_dim, hidden_units=hidden_units,
        out_units=out_units)

    logits = discriminator_forward(z, params)
    logits = jax.block_until_ready(logits)

    ref = _reference_forward(z, params)
    assert logits.shape == (batch, out_units), logits.shape
    assert jnp.allclose(logits, ref, atol=1e-2, rtol=1e-2), (
        "Pallas output mismatch vs. reference")

    print("KERNEL_OK")
</pallas_src>

<mosaic_0001>
module attributes {stable_mosaic.version = 11 : i64} {
  func.func @_discriminator_kernel(%arg0: i32, %arg1: memref<8x128xf32, #tpu.memory_space<vmem>>, %arg2: memref<128x256xbf16, #tpu.memory_space<vmem>>, %arg3: memref<1x256xf32, #tpu.memory_space<vmem>>, %arg4: memref<256x256xbf16, #tpu.memory_space<vmem>>, %arg5: memref<1x256xf32, #tpu.memory_space<vmem>>, %arg6: memref<256x256xbf16, #tpu.memory_space<vmem>>, %arg7: memref<1x256xf32, #tpu.memory_space<vmem>>, %arg8: memref<256x256xbf16, #tpu.memory_space<vmem>>, %arg9: memref<1x256xf32, #tpu.memory_space<vmem>>, %arg10: memref<256x256xbf16, #tpu.memory_space<vmem>>, %arg11: memref<1x256xf32, #tpu.memory_space<vmem>>, %arg12: memref<256x128xbf16, #tpu.memory_space<vmem>>, %arg13: memref<1x128xf32, #tpu.memory_space<vmem>>, %arg14: memref<8x128xf32, #tpu.memory_space<vmem>>) attributes {dimension_semantics = [#tpu.dimension_semantics<parallel>], iteration_bounds = array<i64: 1>, scalar_prefetch = 0 : i64, scratch_operands = 0 : i64, tpu.core_type = #tpu.core_type<tc>, window_params = [{transform_indices = @transform_0, window_bounds = array<i64: 8, 128>}, {pipeline_mode = #tpu.pipeline_mode<synchronous>, transform_indices = @transform_1, window_bounds = array<i64: 128, 256>}, {pipeline_mode = #tpu.pipeline_mode<synchronous>, transform_indices = @transform_2, window_bounds = array<i64: 1, 256>}, {pipeline_mode = #tpu.pipeline_mode<synchronous>, transform_indices = @transform_3, window_bounds = array<i64: 256, 256>}, {pipeline_mode = #tpu.pipeline_mode<synchronous>, transform_indices = @transform_4, window_bounds = array<i64: 1, 256>}, {pipeline_mode = #tpu.pipeline_mode<synchronous>, transform_indices = @transform_5, window_bounds = array<i64: 256, 256>}, {pipeline_mode = #tpu.pipeline_mode<synchronous>, transform_indices = @transform_6, window_bounds = array<i64: 1, 256>}, {pipeline_mode = #tpu.pipeline_mode<synchronous>, transform_indices = @transform_7, window_bounds = array<i64: 256, 256>}, {pipeline_mode = #tpu.pipeline_mode<synchronous>, transform_indices = @transform_8, window_bounds = array<i64: 1, 256>}, {pipeline_mode = #tpu.pipeline_mode<synchronous>, transform_indices = @transform_9, window_bounds = array<i64: 256, 256>}, {pipeline_mode = #tpu.pipeline_mode<synchronous>, transform_indices = @transform_10, window_bounds = array<i64: 1, 256>}, {pipeline_mode = #tpu.pipeline_mode<synchronous>, transform_indices = @transform_11, window_bounds = array<i64: 256, 128>}, {pipeline_mode = #tpu.pipeline_mode<synchronous>, transform_indices = @transform_12, window_bounds = array<i64: 1, 128>}, {transform_indices = @transform_13, window_bounds = array<i64: 8, 128>}]} {
    %c0 = arith.constant 0 : index
    %c0_0 = arith.constant 0 : index
    %0 = vector.load %arg1[%c0, %c0_0] : memref<8x128xf32, #tpu.memory_space<vmem>>, vector<8x128xf32>
    %1 = arith.truncf %0 : vector<8x128xf32> to vector<8x128xbf16>
    %c0_1 = arith.constant 0 : index
    %c0_2 = arith.constant 0 : index
    %2 = vector.load %arg2[%c0_1, %c0_2] : memref<128x256xbf16, #tpu.memory_space<vmem>>, vector<128x256xbf16>
    %cst = arith.constant dense<0.000000e+00> : vector<8x256xf32>
    %3 = tpu.matmul %1, %2, %cst {dimension_numbers = #tpu.dot_dimension_numbers<[1], [0], [0], [1], [0, 0, 1, 1], [], []>} : vector<8x128xbf16>, vector<128x256xbf16>, vector<8x256xf32> -> vector<8x256xf32>
    %c0_3 = arith.constant 0 : index
    %c0_4 = arith.constant 0 : index
    %4 = vector.load %arg3[%c0_3, %c0_4] : memref<1x256xf32, #tpu.memory_space<vmem>>, vector<1x256xf32>
    %5 = vector.broadcast %4 : vector<1x256xf32> to vector<8x256xf32>
    %6 = arith.addf %3, %5 : vector<8x256xf32>
    %cst_5 = arith.constant 0.000000e+00 : f32
    %7 = vector.broadcast %cst_5 : f32 to vector<8x256xf32>
    %8 = arith.cmpf ogt, %6, %7 : vector<8x256xf32>
    %cst_6 = arith.constant 2.000000e-01 : f32
    %9 = vector.broadcast %cst_6 : f32 to vector<8x256xf32>
    %10 = arith.mulf %9, %6 : vector<8x256xf32>
    %11 = arith.select %8, %6, %10 : vector<8x256xi1>, vector<8x256xf32>
    %12 = arith.truncf %11 : vector<8x256xf32> to vector<8x256xbf16>
    %c0_7 = arith.constant 0 : index
    %c0_8 = arith.constant 0 : index
    %13 = vector.load %arg4[%c0_7, %c0_8] : memref<256x256xbf16, #tpu.memory_space<vmem>>, vector<256x256xbf16>
    %cst_9 = arith.constant dense<0.000000e+00> : vector<8x256xf32>
    %14 = tpu.matmul %12, %13, %cst_9 {dimension_numbers = #tpu.dot_dimension_numbers<[1], [0], [0], [1], [0, 0, 1, 1], [], []>} : vector<8x256xbf16>, vector<256x256xbf16>, vector<8x256xf32> -> vector<8x256xf32>
    %c0_10 = arith.constant 0 : index
    %c0_11 = arith.constant 0 : index
    %15 = vector.load %arg5[%c0_10, %c0_11] : memref<1x256xf32, #tpu.memory_space<vmem>>, vector<1x256xf32>
    %16 = vector.broadcast %15 : vector<1x256xf32> to vector<8x256xf32>
    %17 = arith.addf %14, %16 : vector<8x256xf32>
    %cst_12 = arith.constant 0.000000e+00 : f32
    %18 = vector.broadcast %cst_12 : f32 to vector<8x256xf32>
    %19 = arith.cmpf ogt, %17, %18 : vector<8x256xf32>
    %cst_13 = arith.constant 2.000000e-01 : f32
    %20 = vector.broadcast %cst_13 : f32 to vector<8x256xf32>
    %21 = arith.mulf %20, %17 : vector<8x256xf32>
    %22 = arith.select %19, %17, %21 : vector<8x256xi1>, vector<8x256xf32>
    %23 = arith.truncf %22 : vector<8x256xf32> to vector<8x256xbf16>
    %c0_14 = arith.constant 0 : index
    %c0_15 = arith.constant 0 : index
    %24 = vector.load %arg6[%c0_14, %c0_15] : memref<256x256xbf16, #tpu.memory_space<vmem>>, vector<256x256xbf16>
    %cst_16 = arith.constant dense<0.000000e+00> : vector<8x256xf32>
    %25 = tpu.matmul %23, %24, %cst_16 {dimension_numbers = #tpu.dot_dimension_numbers<[1], [0], [0], [1], [0, 0, 1, 1], [], []>} : vector<8x256xbf16>, vector<256x256xbf16>, vector<8x256xf32> -> vector<8x256xf32>
    %c0_17 = arith.constant 0 : index
    %c0_18 = arith.constant 0 : index
    %26 = vector.load %arg7[%c0_17, %c0_18] : memref<1x256xf32, #tpu.memory_space<vmem>>, vector<1x256xf32>
    %27 = vector.broadcast %26 : vector<1x256xf32> to vector<8x256xf32>
    %28 = arith.addf %25, %27 : vector<8x256xf32>
    %cst_19 = arith.constant 0.000000e+00 : f32
    %29 = vector.broadcast %cst_19 : f32 to vector<8x256xf32>
    %30 = arith.cmpf ogt, %28, %29 : vector<8x256xf32>
    %cst_20 = arith.constant 2.000000e-01 : f32
    %31 = vector.broadcast %cst_20 : f32 to vector<8x256xf32>
    %32 = arith.mulf %31, %28 : vector<8x256xf32>
    %33 = arith.select %30, %28, %32 : vector<8x256xi1>, vector<8x256xf32>
    %34 = arith.truncf %33 : vector<8x256xf32> to vector<8x256xbf16>
    %c0_21 = arith.constant 0 : index
    %c0_22 = arith.constant 0 : index
    %35 = vector.load %arg8[%c0_21, %c0_22] : memref<256x256xbf16, #tpu.memory_space<vmem>>, vector<256x256xbf16>
    %cst_23 = arith.constant dense<0.000000e+00> : vector<8x256xf32>
    %36 = tpu.matmul %34, %35, %cst_23 {dimension_numbers = #tpu.dot_dimension_numbers<[1], [0], [0], [1], [0, 0, 1, 1], [], []>} : vector<8x256xbf16>, vector<256x256xbf16>, vector<8x256xf32> -> vector<8x256xf32>
    %c0_24 = arith.constant 0 : index
    %c0_25 = arith.constant 0 : index
    %37 = vector.load %arg9[%c0_24, %c0_25] : memref<1x256xf32, #tpu.memory_space<vmem>>, vector<1x256xf32>
    %38 = vector.broadcast %37 : vector<1x256xf32> to vector<8x256xf32>
    %39 = arith.addf %36, %38 : vector<8x256xf32>
    %cst_26 = arith.constant 0.000000e+00 : f32
    %40 = vector.broadcast %cst_26 : f32 to vector<8x256xf32>
    %41 = arith.cmpf ogt, %39, %40 : vector<8x256xf32>
    %cst_27 = arith.constant 2.000000e-01 : f32
    %42 = vector.broadcast %cst_27 : f32 to vector<8x256xf32>
    %43 = arith.mulf %42, %39 : vector<8x256xf32>
    %44 = arith.select %41, %39, %43 : vector<8x256xi1>, vector<8x256xf32>
    %45 = arith.truncf %44 : vector<8x256xf32> to vector<8x256xbf16>
    %c0_28 = arith.constant 0 : index
    %c0_29 = arith.constant 0 : index
    %46 = vector.load %arg10[%c0_28, %c0_29] : memref<256x256xbf16, #tpu.memory_space<vmem>>, vector<256x256xbf16>
    %cst_30 = arith.constant dense<0.000000e+00> : vector<8x256xf32>
    %47 = tpu.matmul %45, %46, %cst_30 {dimension_numbers = #tpu.dot_dimension_numbers<[1], [0], [0], [1], [0, 0, 1, 1], [], []>} : vector<8x256xbf16>, vector<256x256xbf16>, vector<8x256xf32> -> vector<8x256xf32>
    %c0_31 = arith.constant 0 : index
    %c0_32 = arith.constant 0 : index
    %48 = vector.load %arg11[%c0_31, %c0_32] : memref<1x256xf32, #tpu.memory_space<vmem>>, vector<1x256xf32>
    %49 = vector.broadcast %48 : vector<1x256xf32> to vector<8x256xf32>
    %50 = arith.addf %47, %49 : vector<8x256xf32>
    %cst_33 = arith.constant 0.000000e+00 : f32
    %51 = vector.broadcast %cst_33 : f32 to vector<8x256xf32>
    %52 = arith.cmpf ogt, %50, %51 : vector<8x256xf32>
    %cst_34 = arith.constant 2.000000e-01 : f32
    %53 = vector.broadcast %cst_34 : f32 to vector<8x256xf32>
    %54 = arith.mulf %53, %50 : vector<8x256xf32>
    %55 = arith.select %52, %50, %54 : vector<8x256xi1>, vector<8x256xf32>
    %56 = arith.truncf %55 : vector<8x256xf32> to vector<8x256xbf16>
    %c0_35 = arith.constant 0 : index
    %c0_36 = arith.constant 0 : index
    %57 = vector.load %arg12[%c0_35, %c0_36] : memref<256x128xbf16, #tpu.memory_space<vmem>>, vector<256x128xbf16>
    %cst_37 = arith.constant dense<0.000000e+00> : vector<8x128xf32>
    %58 = tpu.matmul %56, %57, %cst_37 {dimension_numbers = #tpu.dot_dimension_numbers<[1], [0], [0], [1], [0, 0, 1, 1], [], []>} : vector<8x256xbf16>, vector<256x128xbf16>, vector<8x128xf32> -> vector<8x128xf32>
    %c0_38 = arith.constant 0 : index
    %c0_39 = arith.constant 0 : index
    %59 = vector.load %arg13[%c0_38, %c0_39] : memref<1x128xf32, #tpu.memory_space<vmem>>, vector<1x128xf32>
    %60 = vector.broadcast %59 : vector<1x128xf32> to vector<8x128xf32>
    %61 = arith.addf %58, %60 : vector<8x128xf32>
    %c0_40 = arith.constant 0 : index
    %c0_41 = arith.constant 0 : index
    %62 = vector.load %arg14[%c0_40, %c0_41] : memref<8x128xf32, #tpu.memory_space<vmem>>, vector<8x128xf32>
    tpu.vector_store %arg14[%c0_40, %c0_41], %61 {strides = array<i32>} : memref<8x128xf32, #tpu.memory_space<vmem>>, vector<8x128xf32>,
    return
  }
  func.func @transform_0(%arg0: i32) -> (i32, i32) {
    %c0_i32 = arith.constant 0 : i32
    %c0_i32_0 = arith.constant 0 : i32
    return %arg0, %c0_i32 : i32, i32
  }
  func.func @transform_1(%arg0: i32) -> (i32, i32) {
    %c0_i32 = arith.constant 0 : i32
    %c0_i32_0 = arith.constant 0 : i32
    %c0_i32_1 = arith.constant 0 : i32
    return %c0_i32, %c0_i32_0 : i32, i32
  }
  func.func @transform_2(%arg0: i32) -> (i32, i32) {
    %c0_i32 = arith.constant 0 : i32
    %c0_i32_0 = arith.constant 0 : i32
    %c0_i32_1 = arith.constant 0 : i32
    return %c0_i32, %c0_i32_0 : i32, i32
  }
  func.func @transform_3(%arg0: i32) -> (i32, i32) {
    %c0_i32 = arith.constant 0 : i32
    %c0_i32_0 = arith.constant 0 : i32
    %c0_i32_1 = arith.constant 0 : i32
    return %c0_i32, %c0_i32_0 : i32, i32
  }
  func.func @transform_4(%arg0: i32) -> (i32, i32) {
    %c0_i32 = arith.constant 0 : i32
    %c0_i32_0 = arith.constant 0 : i32
    %c0_i32_1 = arith.constant 0 : i32
    return %c0_i32, %c0_i32_0 : i32, i32
  }
  func.func @transform_5(%arg0: i32) -> (i32, i32) {
    %c0_i32 = arith.constant 0 : i32
    %c0_i32_0 = arith.constant 0 : i32
    %c0_i32_1 = arith.constant 0 : i32
    return %c0_i32, %c0_i32_0 : i32, i32
  }
  func.func @transform_6(%arg0: i32) -> (i32, i32) {
    %c0_i32 = arith.constant 0 : i32
    %c0_i32_0 = arith.constant 0 : i32
    %c0_i32_1 = arith.constant 0 : i32
    return %c0_i32, %c0_i32_0 : i32, i32
  }
  func.func @transform_7(%arg0: i32) -> (i32, i32) {
    %c0_i32 = arith.constant 0 : i32
    %c0_i32_0 = arith.constant 0 : i32
    %c0_i32_1 = arith.constant 0 : i32
    return %c0_i32, %c0_i32_0 : i32, i32
  }
  func.func @transform_8(%arg0: i32) -> (i32, i32) {
    %c0_i32 = arith.constant 0 : i32
    %c0_i32_0 = arith.constant 0 : i32
    %c0_i32_1 = arith.constant 0 : i32
    return %c0_i32, %c0_i32_0 : i32, i32
  }
  func.func @transform_9(%arg0: i32) -> (i32, i32) {
    %c0_i32 = arith.constant 0 : i32
    %c0_i32_0 = arith.constant 0 : i32
    %c0_i32_1 = arith.constant 0 : i32
    return %c0_i32, %c0_i32_0 : i32, i32
  }
  func.func @transform_10(%arg0: i32) -> (i32, i32) {
    %c0_i32 = arith.constant 0 : i32
    %c0_i32_0 = arith.constant 0 : i32
    %c0_i32_1 = arith.constant 0 : i32
    return %c0_i32, %c0_i32_0 : i32, i32
  }
  func.func @transform_11(%arg0: i32) -> (i32, i32) {
    %c0_i32 = arith.constant 0 : i32
    %c0_i32_0 = arith.constant 0 : i32
    %c0_i32_1 = arith.constant 0 : i32
    return %c0_i32, %c0_i32_0 : i32, i32
  }
  func.func @transform_12(%arg0: i32) -> (i32, i32) {
    %c0_i32 = arith.constant 0 : i32
    %c0_i32_0 = arith.constant 0 : i32
    %c0_i32_1 = arith.constant 0 : i32
    return %c0_i32, %c0_i32_0 : i32, i32
  }
  func.func @transform_13(%arg0: i32) -> (i32, i32) {
    %c0_i32 = arith.constant 0 : i32
    %c0_i32_0 = arith.constant 0 : i32
    return %arg0, %c0_i32 : i32, i32
  }
}

</mosaic_0001>

<llo_original>
// kernel: tpu_custom_call.1
$region0: #{tpu_custom_call.1}
  #allocation0 [shape = 'u32[]', space=smem, size = 0x4, offset = 0x4, fixed_abs, tag = 'smem constant byte address 0x4 - core index']
  #allocation1 [shape = 'u32[144,128]{1,0:T(1,128)}', space=vmem, size = 0x12000, scoped, tag = 'internal scratch']
  %s0 = inlined_call_operand.hbm [shape: f32[8,128], index: 0, kind: input, shape index: {}]
  %s1 = inlined_call_operand.hbm [shape: bf16[128,256], index: 1, kind: input, shape index: {}]
  %s2 = inlined_call_operand.vmem [shape: f32[1,256], index: 2, kind: input, shape index: {}]
  %s3 = inlined_call_operand.hbm [shape: bf16[256,256], index: 3, kind: input, shape index: {}]
  %s4 = inlined_call_operand.vmem [shape: f32[1,256], index: 4, kind: input, shape index: {}]
  %s5 = inlined_call_operand.hbm [shape: bf16[256,256], index: 5, kind: input, shape index: {}]
  %s6 = inlined_call_operand.vmem [shape: f32[1,256], index: 6, kind: input, shape index: {}]
  %s7 = inlined_call_operand.hbm [shape: bf16[256,256], index: 7, kind: input, shape index: {}]
  %s8 = inlined_call_operand.vmem [shape: f32[1,256], index: 8, kind: input, shape index: {}]
  %s9 = inlined_call_operand.hbm [shape: bf16[256,256], index: 9, kind: input, shape index: {}]
  %s10 = inlined_call_operand.vmem [shape: f32[1,256], index: 10, kind: input, shape index: {}]
  %s11 = inlined_call_operand.hbm [shape: bf16[256,128], index: 11, kind: input, shape index: {}]
  %s12 = inlined_call_operand.vmem [shape: f32[1,128], index: 12, kind: input, shape index: {}]
  %s13 = inlined_call_operand.hbm [shape: f32[8,128], index: 13, kind: output, shape index: {}]
  %s14 = sld [smem:[#allocation0]]
  $region90: #{tpu_custom_call.1} parent=0
    _
  %s16 = ssub.s32 1, %s14
  %s17 = scalar_select 0, %s16, %s14
  $region1: #{tpu_custom_call.1} parent=0
    #allocation2 [shape = 'u8[4096]{0}', space=vmem, size = 0x1000, scoped, tag = 'input window, operand 0, single buffered']
    #allocation3 [shape = 's32[1]{0}', space=sflag, size = 0x4, scoped, tag = 'scoped memory for tpu_custom_call.1']
    #allocation4 [shape = 's32[1]{0}', space=sflag, size = 0x4, scoped, tag = 'scoped memory for tpu_custom_call.1']
    #allocation5 [shape = 'u8[65536]{0}', space=vmem, size = 0x10000, scoped, tag = 'input window, operand 1, single buffered']
    #allocation6 [shape = 's32[1]{0}', space=sflag, size = 0x4, scoped, tag = 'scoped memory for tpu_custom_call.1']
    #allocation7 [shape = 'u8[131072]{0}', space=vmem, size = 0x20000, scoped, tag = 'input window, operand 3, single buffered']
    #allocation8 [shape = 'u8[131072]{0}', space=vmem, size = 0x20000, scoped, tag = 'input window, operand 5, single buffered']
    #allocation9 [shape = 's32[1]{0}', space=sflag, size = 0x4, scoped, tag = 'scoped memory for tpu_custom_call.1']
    #allocation10 [shape = 'u8[131072]{0}', space=vmem, size = 0x20000, scoped, tag = 'input window, operand 7, single buffered']
    #allocation11 [shape = 'u8[131072]{0}', space=vmem, size = 0x20000, scoped, tag = 'input window, operand 9, single buffered']
    #allocation12 [shape = 's32[1]{0}', space=sflag, size = 0x4, scoped, tag = 'scoped memory for tpu_custom_call.1']
    #allocation13 [shape = 'u8[65536]{0}', space=vmem, size = 0x10000, scoped, tag = 'input window, operand 11, single buffered']
    #allocation14 [shape = 'u8[4096]{0}', space=vmem, size = 0x1000, scoped, tag = 'output window, operand 0, single buffered']
    %18 = vsyncpa [#allocation3], 0
    %19 = vsyncpa [#allocation6], 0
    %20 = vsyncpa [#allocation9], 0
    %21 = vsyncpa [#allocation12], 0
    %22 = vsyncpa [#allocation4], 0
    // Predicated region
    $region2: #{tpu_custom_call.1} parent=1 // pred_check
      _
    $region3: #{tpu_custom_call.1} parent=1 // pred_check_branch
      %24 = sbr.rel (0) target = $region5
    $region4: #{tpu_custom_call.1} parent=1 // pred_region
      %s26 = ssub.s32 128, 128
      %27 = vsyncadd [#allocation3], %s26
      %s29 = sshll.u32 [#allocation2], 4
      %s30 = int_to_ptr.vmem [resolvable:$true] %s29
      %32 = dma.hbm_to_vmem [thread:$0]  %s0, 128, %s30, [#allocation3]
    $region5: #{tpu_custom_call.1} parent=1 // pred_fallthru
      _
    // Predicated region
    $region6: #{tpu_custom_call.1} parent=1 // pred_check
      _
    $region7: #{tpu_custom_call.1} parent=1 // pred_check_branch
      %34 = sbr.rel (0) target = $region9
    $region8: #{tpu_custom_call.1} parent=1 // pred_region
      %s36 = ssub.s32 2048, 2048
      %37 = vsyncadd [#allocation6], %s36
      %s38 = sshll.u32 [#allocation5], 4
      %s39 = int_to_ptr.vmem [resolvable:$true] %s38
      %44 = dma.hbm_to_vmem [thread:$0]  %s1, 2048, %s39, [#allocation6], 128, 128, 8
    $region9: #{tpu_custom_call.1} parent=1 // pred_fallthru
      _
    // Predicated region
    $region10: #{tpu_custom_call.1} parent=1 // pred_check
      _
    $region11: #{tpu_custom_call.1} parent=1 // pred_check_branch
      %46 = sbr.rel (0) target = $region13
    $region12: #{tpu_custom_call.1} parent=1 // pred_region
      _
    $region13: #{tpu_custom_call.1} parent=1 // pred_fallthru
      _
    // Predicated region
    $region14: #{tpu_custom_call.1} parent=1 // pred_check
      _
    $region15: #{tpu_custom_call.1} parent=1 // pred_check_branch
      %48 = sbr.rel (0) target = $region17
    $region16: #{tpu_custom_call.1} parent=1 // pred_region
      %s50 = ssub.s32 4096, 4096
      %51 = vsyncadd [#allocation6], %s50
      %s52 = sshll.u32 [#allocation7], 4
      %s53 = int_to_ptr.vmem [resolvable:$true] %s52
      %58 = dma.hbm_to_vmem [thread:$0]  %s3, 4096, %s53, [#allocation6], 128, 128, 8
    $region17: #{tpu_custom_call.1} parent=1 // pred_fallthru
      _
    // Predicated region
    $region18: #{tpu_custom_call.1} parent=1 // pred_check
      _
    $region19: #{tpu_custom_call.1} parent=1 // pred_check_branch
      %60 = sbr.rel (0) target = $region21
    $region20: #{tpu_custom_call.1} parent=1 // pred_region
      _
    $region21: #{tpu_custom_call.1} parent=1 // pred_fallthru
      _
    // Predicated region
    $region22: #{tpu_custom_call.1} parent=1 // pred_check
      _
    $region23: #{tpu_custom_call.1} parent=1 // pred_check_branch
      %62 = sbr.rel (0) target = $region25
    $region24: #{tpu_custom_call.1} parent=1 // pred_region
      %s64 = ssub.s32 4096, 4096
      %65 = vsyncadd [#allocation9], %s64
      %s66 = sshll.u32 [#allocation8], 4
      %s67 = int_to_ptr.vmem [resolvable:$true] %s66
      %72 = dma.hbm_to_vmem [thread:$0]  %s5, 4096, %s67, [#allocation9], 128, 128, 8
    $region25: #{tpu_custom_call.1} parent=1 // pred_fallthru
      _
    // Predicated region
    $region26: #{tpu_custom_call.1} parent=1 // pred_check
      _
    $region27: #{tpu_custom_call.1} parent=1 // pred_check_branch
      %74 = sbr.rel (0) target = $region29
    $region28: #{tpu_custom_call.1} parent=1 // pred_region
      _
    $region29: #{tpu_custom_call.1} parent=1 // pred_fallthru
      _
    // Predicated region
    $region30: #{tpu_custom_call.1} parent=1 // pred_check
      _
    $region31: #{tpu_custom_call.1} parent=1 // pred_check_branch
      %76 = sbr.rel (0) target = $region33
    $region32: #{tpu_custom_call.1} parent=1 // pred_region
      %s78 = ssub.s32 4096, 4096
      %79 = vsyncadd [#allocation9], %s78
      %s80 = sshll.u32 [#allocation10], 4
      %s81 = int_to_ptr.vmem [resolvable:$true] %s80
      %86 = dma.hbm_to_vmem [thread:$0]  %s7, 4096, %s81, [#allocation9], 128, 128, 8
    $region33: #{tpu_custom_call.1} parent=1 // pred_fallthru
      _
    // Predicated region
    $region34: #{tpu_custom_call.1} parent=1 // pred_check
      _
    $region35: #{tpu_custom_call.1} parent=1 // pred_check_branch
      %88 = sbr.rel (0) target = $region37
    $region36: #{tpu_custom_call.1} parent=1 // pred_region
      _
    $region37: #{tpu_custom_call.1} parent=1 // pred_fallthru
      _
    // Predicated region
    $region38: #{tpu_custom_call.1} parent=1 // pred_check
      _
    $region39: #{tpu_custom_call.1} parent=1 // pred_check_branch
      %90 = sbr.rel (0) target = $region41
    $region40: #{tpu_custom_call.1} parent=1 // pred_region
      %s92 = ssub.s32 4096, 4096
      %93 = vsyncadd [#allocation12], %s92
      %s94 = sshll.u32 [#allocation11], 4
      %s95 = int_to_ptr.vmem [resolvable:$true] %s94
      %100 = dma.hbm_to_vmem [thread:$0]  %s9, 4096, %s95, [#allocation12], 128, 128, 8
    $region41: #{tpu_custom_call.1} parent=1 // pred_fallthru
      _
    // Predicated region
    $region42: #{tpu_custom_call.1} parent=1 // pred_check
      _
    $region43: #{tpu_custom_call.1} parent=1 // pred_check_branch
      %102 = sbr.rel (0) target = $region45
    $region44: #{tpu_custom_call.1} parent=1 // pred_region
      _
    $region45: #{tpu_custom_call.1} parent=1 // pred_fallthru
      _
    // Predicated region
    $region46: #{tpu_custom_call.1} parent=1 // pred_check
      _
    $region47: #{tpu_custom_call.1} parent=1 // pred_check_branch
      %104 = sbr.rel (0) target = $region49
    $region48: #{tpu_custom_call.1} parent=1 // pred_region
      %s106 = ssub.s32 2048, 2048
      %107 = vsyncadd [#allocation12], %s106
      %s108 = sshll.u32 [#allocation13], 4
      %s109 = int_to_ptr.vmem [resolvable:$true] %s108
      %114 = dma.hbm_to_vmem [thread:$0]  %s11, 2048, %s109, [#allocation12], 64, 64, 4
    $region49: #{tpu_custom_call.1} parent=1 // pred_fallthru
      _
    // Predicated region
    $region50: #{tpu_custom_call.1} parent=1 // pred_check
      _
    $region51: #{tpu_custom_call.1} parent=1 // pred_check_branch
      %116 = sbr.rel (0) target = $region53
    $region52: #{tpu_custom_call.1} parent=1 // pred_region
      _
    $region53: #{tpu_custom_call.1} parent=1 // pred_fallthru
      _
    // Predicated region
    $region54: #{tpu_custom_call.1} parent=1 // pred_check
      _
    $region55: #{tpu_custom_call.1} parent=1 // pred_check_branch
      %118 = sbr.rel (0) target = $region57
    $region56: #{tpu_custom_call.1} parent=1 // pred_region
      %119 = dma.done [#allocation3], 128
    $region57: #{tpu_custom_call.1} parent=1 // pred_fallthru
      _
    // Predicated region
    $region58: #{tpu_custom_call.1} parent=1 // pred_check
      _
    $region59: #{tpu_custom_call.1} parent=1 // pred_check_branch
      %121 = sbr.rel (0) target = $region61
    $region60: #{tpu_custom_call.1} parent=1 // pred_region
      %122 = dma.done [#allocation6], 2048
    $region61: #{tpu_custom_call.1} parent=1 // pred_fallthru
      _
    // Predicated region
    $region62: #{tpu_custom_call.1} parent=1 // pred_check
      _
    $region63: #{tpu_custom_call.1} parent=1 // pred_check_branch
      %124 = sbr.rel (0) target = $region65
    $region64: #{tpu_custom_call.1} parent=1 // pred_region
      %125 = dma.done [#allocation6], 4096
    $region65: #{tpu_custom_call.1} parent=1 // pred_fallthru
      _
    // Predicated region
    $region66: #{tpu_custom_call.1} parent=1 // pred_check
      _
    $region67: #{tpu_custom_call.1} parent=1 // pred_check_branch
      %127 = sbr.rel (0) target = $region69
    $region68: #{tpu_custom_call.1} parent=1 // pred_region
      %128 = dma.done [#allocation9], 4096
    $region69: #{tpu_custom_call.1} parent=1 // pred_fallthru
      _
    // Predicated region
    $region70: #{tpu_custom_call.1} parent=1 // pred_check
      _
    $region71: #{tpu_custom_call.1} parent=1 // pred_check_branch
      %130 = sbr.rel (0) target = $region73
    $region72: #{tpu_custom_call.1} parent=1 // pred_region
      %131 = dma.done [#allocation9], 4096
    $region73: #{tpu_custom_call.1} parent=1 // pred_fallthru
      _
    // Predicated region
    $region74: #{tpu_custom_call.1} parent=1 // pred_check
      _
    $region75: #{tpu_custom_call.1} parent=1 // pred_check_branch
      %133 = sbr.rel (0) target = $region77
    $region76: #{tpu_custom_call.1} parent=1 // pred_region
      %134 = dma.done [#allocation12], 4096
    $region77: #{tpu_custom_call.1} parent=1 // pred_fallthru
      _
    // Predicated region
    $region78: #{tpu_custom_call.1} parent=1 // pred_check
      _
    $region79: #{tpu_custom_call.1} parent=1 // pred_check_branch
      %136 = sbr.rel (0) target = $region81
    $region80: #{tpu_custom_call.1} parent=1 // pred_region
      %137 = dma.done [#allocation12], 2048
    $region81: #{tpu_custom_call.1} parent=1 // pred_fallthru
      _
    %v139 = vld [vmem:[#allocation2] sm:$0xff]
    %v140 = vpack.c.bf16 %v139, %v139
    %v141 = vld [vmem:[#allocation5] sm:$0xff]
    %v142 = vld [vmem:[#allocation5 + $0x8] sm:$0xff]
    %v143 = vld [vmem:[#allocation5 + $0x10] sm:$0xff]
    %v144 = vld [vmem:[#allocation5 + $0x18] sm:$0xff]
    %v145 = vld [vmem:[#allocation5 + $0x20] sm:$0xff]
    %v146 = vld [vmem:[#allocation5 + $0x28] sm:$0xff]
    %v147 = vld [vmem:[#allocation5 + $0x30] sm:$0xff]
    %v148 = vld [vmem:[#allocation5 + $0x38] sm:$0xff]
    %v149 = vld [vmem:[#allocation5 + $0x40] sm:$0xff]
    %v150 = vld [vmem:[#allocation5 + $0x48] sm:$0xff]
    %v151 = vld [vmem:[#allocation5 + $0x50] sm:$0xff]
    %v152 = vld [vmem:[#allocation5 + $0x58] sm:$0xff]
    %v153 = vld [vmem:[#allocation5 + $0x60] sm:$0xff]
    %v154 = vld [vmem:[#allocation5 + $0x68] sm:$0xff]
    %v155 = vld [vmem:[#allocation5 + $0x70] sm:$0xff]
    %v156 = vld [vmem:[#allocation5 + $0x78] sm:$0xff]
    %v157 = vld [vmem:[%s2] sm:$0x3]
    %v159 = vlaneseq
    %v160 = vshrl.u32 %v159, 7
    %v161 = vsub.s32 0, %v160
    %v162 = vrot.slane %v157, %v161
    %v163 = vlaneseq
    %v164 = vshrl.u32 %v163, 7
    %v165 = vsub.s32 1, %v164
    %v166 = vrot.slane %v157, %v165
    %v185 = vunpack.c.l.b16 %v141
    %v186 = vunpack.c.h.b16 %v141
    %v187 = vunpack.c.l.b16 %v142
    %v188 = vunpack.c.h.b16 %v142
    %v189 = vunpack.c.l.b16 %v143
    %v190 = vunpack.c.h.b16 %v143
    %v191 = vunpack.c.l.b16 %v144
    %v192 = vunpack.c.h.b16 %v144
    %v193 = vunpack.c.l.b16 %v145
    %v194 = vunpack.c.h.b16 %v145
    %v195 = vunpack.c.l.b16 %v146
    %v196 = vunpack.c.h.b16 %v146
    %v197 = vunpack.c.l.b16 %v147
    %v198 = vunpack.c.h.b16 %v147
    %v199 = vunpack.c.l.b16 %v148
    %v200 = vunpack.c.h.b16 %v148
    %v201 = vunpack.c.l.b16 %v149
    %v202 = vunpack.c.h.b16 %v149
    %v203 = vunpack.c.l.b16 %v150
    %v204 = vunpack.c.h.b16 %v150
    %v205 = vunpack.c.l.b16 %v151
    %v206 = vunpack.c.h.b16 %v151
    %v207 = vunpack.c.l.b16 %v152
    %v208 = vunpack.c.h.b16 %v152
    %v209 = vunpack.c.l.b16 %v153
    %v210 = vunpack.c.h.b16 %v153
    %v211 = vunpack.c.l.b16 %v154
    %v212 = vunpack.c.h.b16 %v154
    %v213 = vunpack.c.l.b16 %v155
    %v214 = vunpack.c.h.b16 %v155
    %v215 = vunpack.c.l.b16 %v156
    %v216 = vunpack.c.h.b16 %v156
    %v217 = vpack.c.b16 %v187, %v185
    %v218 = vpack.c.b16 %v188, %v186
    %v219 = vpack.c.b16 %v191, %v189
    %v220 = vpack.c.b16 %v192, %v190
    %v221 = vpack.c.b16 %v195, %v193
    %v222 = vpack.c.b16 %v196, %v194
    %v223 = vpack.c.b16 %v199, %v197
    %v224 = vpack.c.b16 %v200, %v198
    %v225 = vpack.c.b16 %v203, %v201
    %v226 = vpack.c.b16 %v204, %v202
    %v227 = vpack.c.b16 %v207, %v205
    %v228 = vpack.c.b16 %v208, %v206
    %v229 = vpack.c.b16 %v211, %v209
    %v230 = vpack.c.b16 %v212, %v210
    %v231 = vpack.c.b16 %v215, %v213
    %v232 = vpack.c.b16 %v216, %v214
    %249 = vmatprep.subr.bf16.mxu0 %v218
    %250 = vmatpush1.bf16.msra.mxu0 %v217
    %251 = vmatprep.subr.bf16.mxu0 %v220
    %252 = vmatpush1.bf16.msra.mxu0 %v219
    %253 = vmatprep.subr.bf16.mxu0 %v222
    %254 = vmatpush1.bf16.msra.mxu0 %v221
    %255 = vmatprep.subr.bf16.mxu0 %v224
    %256 = vmatpush1.bf16.msra.mxu0 %v223
    %257 = vmatprep.subr.bf16.mxu0 %v226
    %258 = vmatpush1.bf16.msra.mxu0 %v225
    %259 = vmatprep.subr.bf16.mxu0 %v228
    %260 = vmatpush1.bf16.msra.mxu0 %v227
    %261 = vmatprep.subr.bf16.mxu0 %v230
    %262 = vmatpush1.bf16.msra.mxu0 %v229
    %263 = vmatprep.subr.bf16.mxu0 %v232
    %264 = vmatpush1.bf16.msra.mxu0 %v231
    %265 = vmatprep.subr.bf16.mxu0 0
    %266 = vmatpush1.bf16.msra.mxu0 0
    %267 = vmatprep.subr.bf16.mxu0 0
    %268 = vmatpush1.bf16.msra.mxu0 0
    %269 = vmatprep.subr.bf16.mxu0 0
    %270 = vmatpush1.bf16.msra.mxu0 0
    %271 = vmatprep.subr.bf16.mxu0 0
    %272 = vmatpush1.bf16.msra.mxu0 0
    %273 = vmatprep.subr.bf16.mxu0 0
    %274 = vmatpush1.bf16.msra.mxu0 0
    %275 = vmatprep.subr.bf16.mxu0 0
    %276 = vmatpush1.bf16.msra.mxu0 0
    %277 = vmatprep.subr.bf16.mxu0 0
    %278 = vmatpush1.bf16.msra.mxu0 0
    %279 = vmatprep.subr.bf16.mxu0 0
    %280 = vmatpush1.bf16.msra.mxu0 0
    %281 = vmatprep.mubr.bf16.mxu0 0
    %282 = vmatmul.mubr.bf16.gmra.mrb[0].mxu0 %v140
    %v283 = vpop.f32.mrb[0].mxu0
    %v284 = vadd.f32 %v162, %v283
    %v285 = vpop.f32.mrb[0].mxu0
    %v286 = vadd.f32 %v166, %v285
    %v287 = vpop.f32.mrb[0].mxu0
    %v288 = vpop.f32.mrb[0].mxu0
    %289 = vdwg.mxu0
    %vm290 = vcmp.gt.f32.partialorder %v284, 0.0
    %vm291 = vcmp.gt.f32.partialorder %v286, 0.0
    %v292 = vmul.f32 %v284, 0.2
    %v293 = vmul.f32 %v286, 0.2
    %v294 = vsel %vm290, %v284, %v292
    %v295 = vsel %vm291, %v286, %v293
    %v296 = vpack.c.bf16 %v294, %v294
    %v297 = vpack.c.bf16 %v295, %v295
    %v298 = vld [vmem:[#allocation7] sm:$0xff]
    %v299 = vld [vmem:[#allocation7 + $0x8] sm:$0xff]
    %v300 = vld [vmem:[#allocation7 + $0x10] sm:$0xff]
    %v301 = vld [vmem:[#allocation7 + $0x18] sm:$0xff]
    %v302 = vld [vmem:[#allocation7 + $0x20] sm:$0xff]
    %v303 = vld [vmem:[#allocation7 + $0x28] sm:$0xff]
    %v304 = vld [vmem:[#allocation7 + $0x30] sm:$0xff]
    %v305 = vld [vmem:[#allocation7 + $0x38] sm:$0xff]
    %v306 = vld [vmem:[#allocation7 + $0x40] sm:$0xff]
    %v307 = vld [vmem:[#allocation7 + $0x48] sm:$0xff]
    %v308 = vld [vmem:[#allocation7 + $0x50] sm:$0xff]
    %v309 = vld [vmem:[#allocation7 + $0x58] sm:$0xff]
    %v310 = vld [vmem:[#allocation7 + $0x60] sm:$0xff]
    %v311 = vld [vmem:[#allocation7 + $0x68] sm:$0xff]
    %v312 = vld [vmem:[#allocation7 + $0x70] sm:$0xff]
    %v313 = vld [vmem:[#allocation7 + $0x78] sm:$0xff]
    %v314 = vld [vmem:[#allocation7 + $0x80] sm:$0xff]
    %v315 = vld [vmem:[#allocation7 + $0x88] sm:$0xff]
    %v316 = vld [vmem:[#allocation7 + $0x90] sm:$0xff]
    %v317 = vld [vmem:[#allocation7 + $0x98] sm:$0xff]
    %v318 = vld [vmem:[#allocation7 + $0xa0] sm:$0xff]
    %v319 = vld [vmem:[#allocation7 + $0xa8] sm:$0xff]
    %v320 = vld [vmem:[#allocation7 + $0xb0] sm:$0xff]
    %v321 = vld [vmem:[#allocation7 + $0xb8] sm:$0xff]
    %v322 = vld [vmem:[#allocation7 + $0xc0] sm:$0xff]
    %v323 = vld [vmem:[#allocation7 + $0xc8] sm:$0xff]
    %v324 = vld [vmem:[#allocation7 + $0xd0] sm:$0xff]
    %v325 = vld [vmem:[#allocation7 + $0xd8] sm:$0xff]
    %v326 = vld [vmem:[#allocation7 + $0xe0] sm:$0xff]
    %v327 = vld [vmem:[#allocation7 + $0xe8] sm:$0xff]
    %v328 = vld [vmem:[#allocation7 + $0xf0] sm:$0xff]
    %v329 = vld [vmem:[#allocation7 + $0xf8] sm:$0xff]
    %v330 = vld [vmem:[%s4] sm:$0x3]
    %v332 = vlaneseq
    %v333 = vshrl.u32 %v332, 7
    %v334 = vsub.s32 0, %v333
    %v335 = vrot.slane %v330, %v334
    %v336 = vlaneseq
    %v337 = vshrl.u32 %v336, 7
    %v338 = vsub.s32 1, %v337
    %v339 = vrot.slane %v330, %v338
    %v374 = vunpack.c.l.b16 %v298
    %v375 = vunpack.c.h.b16 %v298
    %v376 = vunpack.c.l.b16 %v299
    %v377 = vunpack.c.h.b16 %v299
    %v378 = vunpack.c.l.b16 %v300
    %v379 = vunpack.c.h.b16 %v300
    %v380 = vunpack.c.l.b16 %v301
    %v381 = vunpack.c.h.b16 %v301
    %v382 = vunpack.c.l.b16 %v302
    %v383 = vunpack.c.h.b16 %v302
    %v384 = vunpack.c.l.b16 %v303
    %v385 = vunpack.c.h.b16 %v303
    %v386 = vunpack.c.l.b16 %v304
    %v387 = vunpack.c.h.b16 %v304
    %v388 = vunpack.c.l.b16 %v305
    %v389 = vunpack.c.h.b16 %v305
    %v390 = vunpack.c.l.b16 %v306
    %v391 = vunpack.c.h.b16 %v306
    %v392 = vunpack.c.l.b16 %v307
    %v393 = vunpack.c.h.b16 %v307
    %v394 = vunpack.c.l.b16 %v308
    %v395 = vunpack.c.h.b16 %v308
    %v396 = vunpack.c.l.b16 %v309
    %v397 = vunpack.c.h.b16 %v309
    %v398 = vunpack.c.l.b16 %v310
    %v399 = vunpack.c.h.b16 %v310
    %v400 = vunpack.c.l.b16 %v311
    %v401 = vunpack.c.h.b16 %v311
    %v402 = vunpack.c.l.b16 %v312
    %v403 = vunpack.c.h.b16 %v312
    %v404 = vunpack.c.l.b16 %v313
    %v405 = vunpack.c.h.b16 %v313
    %v406 = vunpack.c.l.b16 %v314
    %v407 = vunpack.c.h.b16 %v314
    %v408 = vunpack.c.l.b16 %v315
    %v409 = vunpack.c.h.b16 %v315
    %v410 = vunpack.c.l.b16 %v316
    %v411 = vunpack.c.h.b16 %v316
    %v412 = vunpack.c.l.b16 %v317
    %v413 = vunpack.c.h.b16 %v317
    %v414 = vunpack.c.l.b16 %v318
    %v415 = vunpack.c.h.b16 %v318
    %v416 = vunpack.c.l.b16 %v319
    %v417 = vunpack.c.h.b16 %v319
    %v418 = vunpack.c.l.b16 %v320
    %v419 = vunpack.c.h.b16 %v320
    %v420 = vunpack.c.l.b16 %v321
    %v421 = vunpack.c.h.b16 %v321
    %v422 = vunpack.c.l.b16 %v322
    %v423 = vunpack.c.h.b16 %v322
    %v424 = vunpack.c.l.b16 %v323
    %v425 = vunpack.c.h.b16 %v323
    %v426 = vunpack.c.l.b16 %v324
    %v427 = vunpack.c.h.b16 %v324
    %v428 = vunpack.c.l.b16 %v325
    %v429 = vunpack.c.h.b16 %v325
    %v430 = vunpack.c.l.b16 %v326
    %v431 = vunpack.c.h.b16 %v326
    %v432 = vunpack.c.l.b16 %v327
    %v433 = vunpack.c.h.b16 %v327
    %v434 = vunpack.c.l.b16 %v328
    %v435 = vunpack.c.h.b16 %v328
    %v436 = vunpack.c.l.b16 %v329
    %v437 = vunpack.c.h.b16 %v329
    %v438 = vpack.c.b16 %v376, %v374
    %v439 = vpack.c.b16 %v377, %v375
    %v440 = vpack.c.b16 %v380, %v378
    %v441 = vpack.c.b16 %v381, %v379
    %v442 = vpack.c.b16 %v384, %v382
    %v443 = vpack.c.b16 %v385, %v383
    %v444 = vpack.c.b16 %v388, %v386
    %v445 = vpack.c.b16 %v389, %v387
    %v446 = vpack.c.b16 %v392, %v390
    %v447 = vpack.c.b16 %v393, %v391
    %v448 = vpack.c.b16 %v396, %v394
    %v449 = vpack.c.b16 %v397, %v395
    %v450 = vpack.c.b16 %v400, %v398
    %v451 = vpack.c.b16 %v401, %v399
    %v452 = vpack.c.b16 %v404, %v402
    %v453 = vpack.c.b16 %v405, %v403
    %v454 = vpack.c.b16 %v408, %v406
    %v455 = vpack.c.b16 %v409, %v407
    %v456 = vpack.c.b16 %v412, %v410
    %v457 = vpack.c.b16 %v413, %v411
    %v458 = vpack.c.b16 %v416, %v414
    %v459 = vpack.c.b16 %v417, %v415
    %v460 = vpack.c.b16 %v420, %v418
    %v461 = vpack.c.b16 %v421, %v419
    %v462 = vpack.c.b16 %v424, %v422
    %v463 = vpack.c.b16 %v425, %v423
    %v464 = vpack.c.b16 %v428, %v426
    %v465 = vpack.c.b16 %v429, %v427
    %v466 = vpack.c.b16 %v432, %v430
    %v467 = vpack.c.b16 %v433, %v431
    %v468 = vpack.c.b16 %v436, %v434
    %v469 = vpack.c.b16 %v437, %v435
    %502 = vmatprep.subr.bf16.mxu0 %v439
    %503 = vmatpush1.bf16.msra.mxu0 %v438
    %504 = vmatprep.subr.bf16.mxu0 %v441
    %505 = vmatpush1.bf16.msra.mxu0 %v440
    %506 = vmatprep.subr.bf16.mxu0 %v443
    %507 = vmatpush1.bf16.msra.mxu0 %v442
    %508 = vmatprep.subr.bf16.mxu0 %v445
    %509 = vmatpush1.bf16.msra.mxu0 %v444
    %510 = vmatprep.subr.bf16.mxu0 %v447
    %511 = vmatpush1.bf16.msra.mxu0 %v446
    %512 = vmatprep.subr.bf16.mxu0 %v449
    %513 = vmatpush1.bf16.msra.mxu0 %v448
    %514 = vmatprep.subr.bf16.mxu0 %v451
    %515 = vmatpush1.bf16.msra.mxu0 %v450
    %516 = vmatprep.subr.bf16.mxu0 %v453
    %517 = vmatpush1.bf16.msra.mxu0 %v452
    %518 = vmatprep.subr.bf16.mxu0 %v455
    %519 = vmatpush1.bf16.msra.mxu0 %v454
    %520 = vmatprep.subr.bf16.mxu0 %v457
    %521 = vmatpush1.bf16.msra.mxu0 %v456
    %522 = vmatprep.subr.bf16.mxu0 %v459
    %523 = vmatpush1.bf16.msra.mxu0 %v458
    %524 = vmatprep.subr.bf16.mxu0 %v461
    %525 = vmatpush1.bf16.msra.mxu0 %v460
    %526 = vmatprep.subr.bf16.mxu0 %v463
    %527 = vmatpush1.bf16.msra.mxu0 %v462
    %528 = vmatprep.subr.bf16.mxu0 %v465
    %529 = vmatpush1.bf16.msra.mxu0 %v464
    %530 = vmatprep.subr.bf16.mxu0 %v467
    %531 = vmatpush1.bf16.msra.mxu0 %v466
    %532 = vmatprep.subr.bf16.mxu0 %v469
    %533 = vmatpush1.bf16.msra.mxu0 %v468
    %534 = vmatprep.mubr.bf16.mxu0 %v297
    %535 = vmatmul.mubr.bf16.gmra.mrb[0].mxu0 %v296
    %v536 = vpop.f32.mrb[0].mxu0
    %v537 = vadd.f32 %v335, %v536
    %v538 = vpop.f32.mrb[0].mxu0
    %v539 = vadd.f32 %v339, %v538
    %v540 = vpop.f32.mrb[0].mxu0
    %v541 = vpop.f32.mrb[0].mxu0
    %542 = vdwg.mxu0
    %vm543 = vcmp.gt.f32.partialorder %v537, 0.0
    %vm544 = vcmp.gt.f32.partialorder %v539, 0.0
    %v545 = vmul.f32 %v537, 0.2
    %v546 = vmul.f32 %v539, 0.2
    %v547 = vsel %vm543, %v537, %v545
    %v548 = vsel %vm544, %v539, %v546
    %v549 = vpack.c.bf16 %v547, %v547
    %v550 = vpack.c.bf16 %v548, %v548
    %v551 = vld [vmem:[#allocation8] sm:$0xff]
    %v552 = vld [vmem:[#allocation8 + $0x8] sm:$0xff]
    %v553 = vld [vmem:[#allocation8 + $0x10] sm:$0xff]
    %v554 = vld [vmem:[#allocation8 + $0x18] sm:$0xff]
    %v555 = vld [vmem:[#allocation8 + $0x20] sm:$0xff]
    %v556 = vld [vmem:[#allocation8 + $0x28] sm:$0xff]
    %v557 = vld [vmem:[#allocation8 + $0x30] sm:$0xff]
    %v558 = vld [vmem:[#allocation8 + $0x38] sm:$0xff]
    %v559 = vld [vmem:[#allocation8 + $0x40] sm:$0xff]
    %v560 = vld [vmem:[#allocation8 + $0x48] sm:$0xff]
    %v561 = vld [vmem:[#allocation8 + $0x50] sm:$0xff]
    %v562 = vld [vmem:[#allocation8 + $0x58] sm:$0xff]
    %v563 = vld [vmem:[#allocation8 + $0x60] sm:$0xff]
    %v564 = vld [vmem:[#allocation8 + $0x68] sm:$0xff]
    %v565 = vld [vmem:[#allocation8 + $0x70] sm:$0xff]
    %v566 = vld [vmem:[#allocation8 + $0x78] sm:$0xff]
    %v567 = vld [vmem:[#allocation8 + $0x80] sm:$0xff]
    %v568 = vld [vmem:[#allocation8 + $0x88] sm:$0xff]
    %v569 = vld [vmem:[#allocation8 + $0x90] sm:$0xff]
    %v570 = vld [vmem:[#allocation8 + $0x98] sm:$0xff]
    %v571 = vld [vmem:[#allocation8 + $0xa0] sm:$0xff]
    %v572 = vld [vmem:[#allocation8 + $0xa8] sm:$0xff]
    %v573 = vld [vmem:[#allocation8 + $0xb0] sm:$0xff]
    %v574 = vld [vmem:[#allocation8 + $0xb8] sm:$0xff]
    %v575 = vld [vmem:[#allocation8 + $0xc0] sm:$0xff]
    %v576 = vld [vmem:[#allocation8 + $0xc8] sm:$0xff]
    %v577 = vld [vmem:[#allocation8 + $0xd0] sm:$0xff]
    %v578 = vld [vmem:[#allocation8 + $0xd8] sm:$0xff]
    %v579 = vld [vmem:[#allocation8 + $0xe0] sm:$0xff]
    %v580 = vld [vmem:[#allocation8 + $0xe8] sm:$0xff]
    %v581 = vld [vmem:[#allocation8 + $0xf0] sm:$0xff]
    %v582 = vld [vmem:[#allocation8 + $0xf8] sm:$0xff]
    %v583 = vld [vmem:[%s6] sm:$0x3]
    %v585 = vlaneseq
    %v586 = vshrl.u32 %v585, 7
    %v587 = vsub.s32 0, %v586
    %v588 = vrot.slane %v583, %v587
    %v589 = vlaneseq
    %v590 = vshrl.u32 %v589, 7
    %v591 = vsub.s32 1, %v590
    %v592 = vrot.slane %v583, %v591
    %v627 = vunpack.c.l.b16 %v551
    %v628 = vunpack.c.h.b16 %v551
    %v629 = vunpack.c.l.b16 %v552
    %v630 = vunpack.c.h.b16 %v552
    %v631 = vunpack.c.l.b16 %v553
    %v632 = vunpack.c.h.b16 %v553
    %v633 = vunpack.c.l.b16 %v554
    %v634 = vunpack.c.h.b16 %v554
    %v635 = vunpack.c.l.b16 %v555
    %v636 = vunpack.c.h.b16 %v555
    %v637 = vunpack.c.l.b16 %v556
    %v638 = vunpack.c.h.b16 %v556
    %v639 = vunpack.c.l.b16 %v557
    %v640 = vunpack.c.h.b16 %v557
    %v641 = vunpack.c.l.b16 %v558
    %v642 = vunpack.c.h.b16 %v558
    %v643 = vunpack.c.l.b16 %v559
    %v644 = vunpack.c.h.b16 %v559
    %v645 = vunpack.c.l.b16 %v560
    %v646 = vunpack.c.h.b16 %v560
    %v647 = vunpack.c.l.b16 %v561
    %v648 = vunpack.c.h.b16 %v561
    %v649 = vunpack.c.l.b16 %v562
    %v650 = vunpack.c.h.b16 %v562
    %v651 = vunpack.c.l.b16 %v563
    %v652 = vunpack.c.h.b16 %v563
    %v653 = vunpack.c.l.b16 %v564
    %v654 = vunpack.c.h.b16 %v564
    %v655 = vunpack.c.l.b16 %v565
    %v656 = vunpack.c.h.b16 %v565
    %v657 = vunpack.c.l.b16 %v566
    %v658 = vunpack.c.h.b16 %v566
    %v659 = vunpack.c.l.b16 %v567
    %v660 = vunpack.c.h.b16 %v567
    %v661 = vunpack.c.l.b16 %v568
    %v662 = vunpack.c.h.b16 %v568
    %v663 = vunpack.c.l.b16 %v569
    %v664 = vunpack.c.h.b16 %v569
    %v665 = vunpack.c.l.b16 %v570
    %v666 = vunpack.c.h.b16 %v570
    %v667 = vunpack.c.l.b16 %v571
    %v668 = vunpack.c.h.b16 %v571
    %v669 = vunpack.c.l.b16 %v572
    %v670 = vunpack.c.h.b16 %v572
    %v671 = vunpack.c.l.b16 %v573
    %v672 = vunpack.c.h.b16 %v573
    %v673 = vunpack.c.l.b16 %v574
    %v674 = vunpack.c.h.b16 %v574
    %v675 = vunpack.c.l.b16 %v575
    %v676 = vunpack.c.h.b16 %v575
    %v677 = vunpack.c.l.b16 %v576
    %v678 = vunpack.c.h.b16 %v576
    %v679 = vunpack.c.l.b16 %v577
    %v680 = vunpack.c.h.b16 %v577
    %v681 = vunpack.c.l.b16 %v578
    %v682 = vunpack.c.h.b16 %v578
    %v683 = vunpack.c.l.b16 %v579
    %v684 = vunpack.c.h.b16 %v579
    %v685 = vunpack.c.l.b16 %v580
    %v686 = vunpack.c.h.b16 %v580
    %v687 = vunpack.c.l.b16 %v581
    %v688 = vunpack.c.h.b16 %v581
    %v689 = vunpack.c.l.b16 %v582
    %v690 = vunpack.c.h.b16 %v582
    %v691 = vpack.c.b16 %v629, %v627
    %v692 = vpack.c.b16 %v630, %v628
    %v693 = vpack.c.b16 %v633, %v631
    %v694 = vpack.c.b16 %v634, %v632
    %v695 = vpack.c.b16 %v637, %v635
    %v696 = vpack.c.b16 %v638, %v636
    %v697 = vpack.c.b16 %v641, %v639
    %v698 = vpack.c.b16 %v642, %v640
    %v699 = vpack.c.b16 %v645, %v643
    %v700 = vpack.c.b16 %v646, %v644
    %v701 = vpack.c.b16 %v649, %v647
    %v702 = vpack.c.b16 %v650, %v648
    %v703 = vpack.c.b16 %v653, %v651
    %v704 = vpack.c.b16 %v654, %v652
    %v705 = vpack.c.b16 %v657, %v655
    %v706 = vpack.c.b16 %v658, %v656
    %v707 = vpack.c.b16 %v661, %v659
    %v708 = vpack.c.b16 %v662, %v660
    %v709 = vpack.c.b16 %v665, %v663
    %v710 = vpack.c.b16 %v666, %v664
    %v711 = vpack.c.b16 %v669, %v667
    %v712 = vpack.c.b16 %v670, %v668
    %v713 = vpack.c.b16 %v673, %v671
    %v714 = vpack.c.b16 %v674, %v672
    %v715 = vpack.c.b16 %v677, %v675
    %v716 = vpack.c.b16 %v678, %v676
    %v717 = vpack.c.b16 %v681, %v679
    %v718 = vpack.c.b16 %v682, %v680
    %v719 = vpack.c.b16 %v685, %v683
    %v720 = vpack.c.b16 %v686, %v684
    %v721 = vpack.c.b16 %v689, %v687
    %v722 = vpack.c.b16 %v690, %v688
    %755 = vmatprep.subr.bf16.mxu0 %v692
    %756 = vmatpush1.bf16.msra.mxu0 %v691
    %757 = vmatprep.subr.bf16.mxu0 %v694
    %758 = vmatpush1.bf16.msra.mxu0 %v693
    %759 = vmatprep.subr.bf16.mxu0 %v696
    %760 = vmatpush1.bf16.msra.mxu0 %v695
    %761 = vmatprep.subr.bf16.mxu0 %v698
    %762 = vmatpush1.bf16.msra.mxu0 %v697
    %763 = vmatprep.subr.bf16.mxu0 %v700
    %764 = vmatpush1.bf16.msra.mxu0 %v699
    %765 = vmatprep.subr.bf16.mxu0 %v702
    %766 = vmatpush1.bf16.msra.mxu0 %v701
    %767 = vmatprep.subr.bf16.mxu0 %v704
    %768 = vmatpush1.bf16.msra.mxu0 %v703
    %769 = vmatprep.subr.bf16.mxu0 %v706
    %770 = vmatpush1.bf16.msra.mxu0 %v705
    %771 = vmatprep.subr.bf16.mxu0 %v708
    %772 = vmatpush1.bf16.msra.mxu0 %v707
    %773 = vmatprep.subr.bf16.mxu0 %v710
    %774 = vmatpush1.bf16.msra.mxu0 %v709
    %775 = vmatprep.subr.bf16.mxu0 %v712
    %776 = vmatpush1.bf16.msra.mxu0 %v711
    %777 = vmatprep.subr.bf16.mxu0 %v714
    %778 = vmatpush1.bf16.msra.mxu0 %v713
    %779 = vmatprep.subr.bf16.mxu0 %v716
    %780 = vmatpush1.bf16.msra.mxu0 %v715
    %781 = vmatprep.subr.bf16.mxu0 %v718
    %782 = vmatpush1.bf16.msra.mxu0 %v717
    %783 = vmatprep.subr.bf16.mxu0 %v720
    %784 = vmatpush1.bf16.msra.mxu0 %v719
    %785 = vmatprep.subr.bf16.mxu0 %v722
    %786 = vmatpush1.bf16.msra.mxu0 %v721
    %787 = vmatprep.mubr.bf16.mxu0 %v550
    %788 = vmatmul.mubr.bf16.gmra.mrb[0].mxu0 %v549
    %v789 = vpop.f32.mrb[0].mxu0
    %v790 = vadd.f32 %v588, %v789
    %v791 = vpop.f32.mrb[0].mxu0
    %v792 = vadd.f32 %v592, %v791
    %v793 = vpop.f32.mrb[0].mxu0
    %v794 = vpop.f32.mrb[0].mxu0
    %795 = vdwg.mxu0
    %vm796 = vcmp.gt.f32.partialorder %v790, 0.0
    %vm797 = vcmp.gt.f32.partialorder %v792, 0.0
    %v798 = vmul.f32 %v790, 0.2
    %v799 = vmul.f32 %v792, 0.2
    %v800 = vsel %vm796, %v790, %v798
    %v801 = vsel %vm797, %v792, %v799
    %v802 = vpack.c.bf16 %v800, %v800
    %v803 = vpack.c.bf16 %v801, %v801
    %v804 = vld [vmem:[#allocation10] sm:$0xff]
    %v805 = vld [vmem:[#allocation10 + $0x8] sm:$0xff]
    %v806 = vld [vmem:[#allocation10 + $0x10] sm:$0xff]
    %v807 = vld [vmem:[#allocation10 + $0x18] sm:$0xff]
    %v808 = vld [vmem:[#allocation10 + $0x20] sm:$0xff]
    %v809 = vld [vmem:[#allocation10 + $0x28] sm:$0xff]
    %v810 = vld [vmem:[#allocation10 + $0x30] sm:$0xff]
    %v811 = vld [vmem:[#allocation10 + $0x38] sm:$0xff]
    %v812 = vld [vmem:[#allocation10 + $0x40] sm:$0xff]
    %v813 = vld [vmem:[#allocation10 + $0x48] sm:$0xff]
    %v814 = vld [vmem:[#allocation10 + $0x50] sm:$0xff]
    %v815 = vld [vmem:[#allocation10 + $0x58] sm:$0xff]
    %v816 = vld [vmem:[#allocation10 + $0x60] sm:$0xff]
    %v817 = vld [vmem:[#allocation10 + $0x68] sm:$0xff]
    %v818 = vld [vmem:[#allocation10 + $0x70] sm:$0xff]
    %v819 = vld [vmem:[#allocation10 + $0x78] sm:$0xff]
    %v820 = vld [vmem:[#allocation10 + $0x80] sm:$0xff]
    %v821 = vld [vmem:[#allocation10 + $0x88] sm:$0xff]
    %v822 = vld [vmem:[#allocation10 + $0x90] sm:$0xff]
    %v823 = vld [vmem:[#allocation10 + $0x98] sm:$0xff]
    %v824 = vld [vmem:[#allocation10 + $0xa0] sm:$0xff]
    %v825 = vld [vmem:[#allocation10 + $0xa8] sm:$0xff]
    %v826 = vld [vmem:[#allocation10 + $0xb0] sm:$0xff]
    %v827 = vld [vmem:[#allocation10 + $0xb8] sm:$0xff]
    %v828 = vld [vmem:[#allocation10 + $0xc0] sm:$0xff]
    %v829 = vld [vmem:[#allocation10 + $0xc8] sm:$0xff]
    %v830 = vld [vmem:[#allocation10 + $0xd0] sm:$0xff]
    %v831 = vld [vmem:[#allocation10 + $0xd8] sm:$0xff]
    %v832 = vld [vmem:[#allocation10 + $0xe0] sm:$0xff]
    %v833 = vld [vmem:[#allocation10 + $0xe8] sm:$0xff]
    %v834 = vld [vmem:[#allocation10 + $0xf0] sm:$0xff]
    %v835 = vld [vmem:[#allocation10 + $0xf8] sm:$0xff]
    %v836 = vld [vmem:[%s8] sm:$0x3]
    %v838 = vlaneseq
    %v839 = vshrl.u32 %v838, 7
    %v840 = vsub.s32 0, %v839
    %v841 = vrot.slane %v836, %v840
    %v842 = vlaneseq
    %v843 = vshrl.u32 %v842, 7
    %v844 = vsub.s32 1, %v843
    %v845 = vrot.slane %v836, %v844
    %v880 = vunpack.c.l.b16 %v804
    %v881 = vunpack.c.h.b16 %v804
    %v882 = vunpack.c.l.b16 %v805
    %v883 = vunpack.c.h.b16 %v805
    %v884 = vunpack.c.l.b16 %v806
    %v885 = vunpack.c.h.b16 %v806
    %v886 = vunpack.c.l.b16 %v807
    %v887 = vunpack.c.h.b16 %v807
    %v888 = vunpack.c.l.b16 %v808
    %v889 = vunpack.c.h.b16 %v808
    %v890 = vunpack.c.l.b16 %v809
    %v891 = vunpack.c.h.b16 %v809
    %v892 = vunpack.c.l.b16 %v810
    %v893 = vunpack.c.h.b16 %v810
    %v894 = vunpack.c.l.b16 %v811
    %v895 = vunpack.c.h.b16 %v811
    %v896 = vunpack.c.l.b16 %v812
    %v897 = vunpack.c.h.b16 %v812
    %v898 = vunpack.c.l.b16 %v813
    %v899 = vunpack.c.h.b16 %v813
    %v900 = vunpack.c.l.b16 %v814
    %v901 = vunpack.c.h.b16 %v814
    %v902 = vunpack.c.l.b16 %v815
    %v903 = vunpack.c.h.b16 %v815
    %v904 = vunpack.c.l.b16 %v816
    %v905 = vunpack.c.h.b16 %v816
    %v906 = vunpack.c.l.b16 %v817
    %v907 = vunpack.c.h.b16 %v817
    %v908 = vunpack.c.l.b16 %v818
    %v909 = vunpack.c.h.b16 %v818
    %v910 = vunpack.c.l.b16 %v819
    %v911 = vunpack.c.h.b16 %v819
    %v912 = vunpack.c.l.b16 %v820
    %v913 = vunpack.c.h.b16 %v820
    %v914 = vunpack.c.l.b16 %v821
    %v915 = vunpack.c.h.b16 %v821
    %v916 = vunpack.c.l.b16 %v822
    %v917 = vunpack.c.h.b16 %v822
    %v918 = vunpack.c.l.b16 %v823
    %v919 = vunpack.c.h.b16 %v823
    %v920 = vunpack.c.l.b16 %v824
    %v921 = vunpack.c.h.b16 %v824
    %v922 = vunpack.c.l.b16 %v825
    %v923 = vunpack.c.h.b16 %v825
    %v924 = vunpack.c.l.b16 %v826
    %v925 = vunpack.c.h.b16 %v826
    %v926 = vunpack.c.l.b16 %v827
    %v927 = vunpack.c.h.b16 %v827
    %v928 = vunpack.c.l.b16 %v828
    %v929 = vunpack.c.h.b16 %v828
    %v930 = vunpack.c.l.b16 %v829
    %v931 = vunpack.c.h.b16 %v829
    %v932 = vunpack.c.l.b16 %v830
    %v933 = vunpack.c.h.b16 %v830
    %v934 = vunpack.c.l.b16 %v831
    %v935 = vunpack.c.h.b16 %v831
    %v936 = vunpack.c.l.b16 %v832
    %v937 = vunpack.c.h.b16 %v832
    %v938 = vunpack.c.l.b16 %v833
    %v939 = vunpack.c.h.b16 %v833
    %v940 = vunpack.c.l.b16 %v834
    %v941 = vunpack.c.h.b16 %v834
    %v942 = vunpack.c.l.b16 %v835
    %v943 = vunpack.c.h.b16 %v835
    %v944 = vpack.c.b16 %v882, %v880
    %v945 = vpack.c.b16 %v883, %v881
    %v946 = vpack.c.b16 %v886, %v884
    %v947 = vpack.c.b16 %v887, %v885
    %v948 = vpack.c.b16 %v890, %v888
    %v949 = vpack.c.b16 %v891, %v889
    %v950 = vpack.c.b16 %v894, %v892
    %v951 = vpack.c.b16 %v895, %v893
    %v952 = vpack.c.b16 %v898, %v896
    %v953 = vpack.c.b16 %v899, %v897
    %v954 = vpack.c.b16 %v902, %v900
    %v955 = vpack.c.b16 %v903, %v901
    %v956 = vpack.c.b16 %v906, %v904
    %v957 = vpack.c.b16 %v907, %v905
    %v958 = vpack.c.b16 %v910, %v908
    %v959 = vpack.c.b16 %v911, %v909
    %v960 = vpack.c.b16 %v914, %v912
    %v961 = vpack.c.b16 %v915, %v913
    %v962 = vpack.c.b16 %v918, %v916
    %v963 = vpack.c.b16 %v919, %v917
    %v964 = vpack.c.b16 %v922, %v920
    %v965 = vpack.c.b16 %v923, %v921
    %v966 = vpack.c.b16 %v926, %v924
    %v967 = vpack.c.b16 %v927, %v925
    %v968 = vpack.c.b16 %v930, %v928
    %v969 = vpack.c.b16 %v931, %v929
    %v970 = vpack.c.b16 %v934, %v932
    %v971 = vpack.c.b16 %v935, %v933
    %v972 = vpack.c.b16 %v938, %v936
    %v973 = vpack.c.b16 %v939, %v937
    %v974 = vpack.c.b16 %v942, %v940
    %v975 = vpack.c.b16 %v943, %v941
    %1008 = vmatprep.subr.bf16.mxu0 %v945
    %1009 = vmatpush1.bf16.msra.mxu0 %v944
    %1010 = vmatprep.subr.bf16.mxu0 %v947
    %1011 = vmatpush1.bf16.msra.mxu0 %v946
    %1012 = vmatprep.subr.bf16.mxu0 %v949
    %1013 = vmatpush1.bf16.msra.mxu0 %v948
    %1014 = vmatprep.subr.bf16.mxu0 %v951
    %1015 = vmatpush1.bf16.msra.mxu0 %v950
    %1016 = vmatprep.subr.bf16.mxu0 %v953
    %1017 = vmatpush1.bf16.msra.mxu0 %v952
    %1018 = vmatprep.subr.bf16.mxu0 %v955
    %1019 = vmatpush1.bf16.msra.mxu0 %v954
    %1020 = vmatprep.subr.bf16.mxu0 %v957
    %1021 = vmatpush1.bf16.msra.mxu0 %v956
    %1022 = vmatprep.subr.bf16.mxu0 %v959
    %1023 = vmatpush1.bf16.msra.mxu0 %v958
    %1024 = vmatprep.subr.bf16.mxu0 %v961
    %1025 = vmatpush1.bf16.msra.mxu0 %v960
    %1026 = vmatprep.subr.bf16.mxu0 %v963
    %1027 = vmatpush1.bf16.msra.mxu0 %v962
    %1028 = vmatprep.subr.bf16.mxu0 %v965
    %1029 = vmatpush1.bf16.msra.mxu0 %v964
    %1030 = vmatprep.subr.bf16.mxu0 %v967
    %1031 = vmatpush1.bf16.msra.mxu0 %v966
    %1032 = vmatprep.subr.bf16.mxu0 %v969
    %1033 = vmatpush1.bf16.msra.mxu0 %v968
    %1034 = vmatprep.subr.bf16.mxu0 %v971
    %1035 = vmatpush1.bf16.msra.mxu0 %v970
    %1036 = vmatprep.subr.bf16.mxu0 %v973
    %1037 = vmatpush1.bf16.msra.mxu0 %v972
    %1038 = vmatprep.subr.bf16.mxu0 %v975
    %1039 = vmatpush1.bf16.msra.mxu0 %v974
    %1040 = vmatprep.mubr.bf16.mxu0 %v803
    %1041 = vmatmul.mubr.bf16.gmra.mrb[0].mxu0 %v802
    %v1042 = vpop.f32.mrb[0].mxu0
    %v1043 = vadd.f32 %v841, %v1042
    %v1044 = vpop.f32.mrb[0].mxu0
    %v1045 = vadd.f32 %v845, %v1044
    %v1046 = vpop.f32.mrb[0].mxu0
    %v1047 = vpop.f32.mrb[0].mxu0
    %1048 = vdwg.mxu0
    %vm1049 = vcmp.gt.f32.partialorder %v1043, 0.0
    %vm1050 = vcmp.gt.f32.partialorder %v1045, 0.0
    %v1051 = vmul.f32 %v1043, 0.2
    %v1052 = vmul.f32 %v1045, 0.2
    %v1053 = vsel %vm1049, %v1043, %v1051
    %v1054 = vsel %vm1050, %v1045, %v1052
    %v1055 = vpack.c.bf16 %v1053, %v1053
    %v1056 = vpack.c.bf16 %v1054, %v1054
    %v1057 = vld [vmem:[#allocation11] sm:$0xff]
    %v1058 = vld [vmem:[#allocation11 + $0x8] sm:$0xff]
    %v1059 = vld [vmem:[#allocation11 + $0x10] sm:$0xff]
    %v1060 = vld [vmem:[#allocation11 + $0x18] sm:$0xff]
    %v1061 = vld [vmem:[#allocation11 + $0x20] sm:$0xff]
    %v1062 = vld [vmem:[#allocation11 + $0x28] sm:$0xff]
    %v1063 = vld [vmem:[#allocation11 + $0x30] sm:$0xff]
    %v1064 = vld [vmem:[#allocation11 + $0x38] sm:$0xff]
    %v1065 = vld [vmem:[#allocation11 + $0x40] sm:$0xff]
    %v1066 = vld [vmem:[#allocation11 + $0x48] sm:$0xff]
    %v1067 = vld [vmem:[#allocation11 + $0x50] sm:$0xff]
    %v1068 = vld [vmem:[#allocation11 + $0x58] sm:$0xff]
    %v1069 = vld [vmem:[#allocation11 + $0x60] sm:$0xff]
    %v1070 = vld [vmem:[#allocation11 + $0x68] sm:$0xff]
    %v1071 = vld [vmem:[#allocation11 + $0x70] sm:$0xff]
    %v1072 = vld [vmem:[#allocation11 + $0x78] sm:$0xff]
    %v1073 = vld [vmem:[#allocation11 + $0x80] sm:$0xff]
    %v1074 = vld [vmem:[#allocation11 + $0x88] sm:$0xff]
    %v1075 = vld [vmem:[#allocation11 + $0x90] sm:$0xff]
    %v1076 = vld [vmem:[#allocation11 + $0x98] sm:$0xff]
    %v1077 = vld [vmem:[#allocation11 + $0xa0] sm:$0xff]
    %v1078 = vld [vmem:[#allocation11 + $0xa8] sm:$0xff]
    %v1079 = vld [vmem:[#allocation11 + $0xb0] sm:$0xff]
    %v1080 = vld [vmem:[#allocation11 + $0xb8] sm:$0xff]
    %v1081 = vld [vmem:[#allocation11 + $0xc0] sm:$0xff]
    %v1082 = vld [vmem:[#allocation11 + $0xc8] sm:$0xff]
    %v1083 = vld [vmem:[#allocation11 + $0xd0] sm:$0xff]
    %v1084 = vld [vmem:[#allocation11 + $0xd8] sm:$0xff]
    %v1085 = vld [vmem:[#allocation11 + $0xe0] sm:$0xff]
    %v1086 = vld [vmem:[#allocation11 + $0xe8] sm:$0xff]
    %v1087 = vld [vmem:[#allocation11 + $0xf0] sm:$0xff]
    %v1088 = vld [vmem:[#allocation11 + $0xf8] sm:$0xff]
    %v1089 = vld [vmem:[%s10] sm:$0x3]
    %v1091 = vlaneseq
    %v1092 = vshrl.u32 %v1091, 7
    %v1093 = vsub.s32 0, %v1092
    %v1094 = vrot.slane %v1089, %v1093
    %v1095 = vlaneseq
    %v1096 = vshrl.u32 %v1095, 7
    %v1097 = vsub.s32 1, %v1096
    %v1098 = vrot.slane %v1089, %v1097
    %v1133 = vunpack.c.l.b16 %v1057
    %v1134 = vunpack.c.h.b16 %v1057
    %v1135 = vunpack.c.l.b16 %v1058
    %v1136 = vunpack.c.h.b16 %v1058
    %v1137 = vunpack.c.l.b16 %v1059
    %v1138 = vunpack.c.h.b16 %v1059
    %v1139 = vunpack.c.l.b16 %v1060
    %v1140 = vunpack.c.h.b16 %v1060
    %v1141 = vunpack.c.l.b16 %v1061
    %v1142 = vunpack.c.h.b16 %v1061
    %v1143 = vunpack.c.l.b16 %v1062
    %v1144 = vunpack.c.h.b16 %v1062
    %v1145 = vunpack.c.l.b16 %v1063
    %v1146 = vunpack.c.h.b16 %v1063
    %v1147 = vunpack.c.l.b16 %v1064
    %v1148 = vunpack.c.h.b16 %v1064
    %v1149 = vunpack.c.l.b16 %v1065
    %v1150 = vunpack.c.h.b16 %v1065
    %v1151 = vunpack.c.l.b16 %v1066
    %v1152 = vunpack.c.h.b16 %v1066
    %v1153 = vunpack.c.l.b16 %v1067
    %v1154 = vunpack.c.h.b16 %v1067
    %v1155 = vunpack.c.l.b16 %v1068
    %v1156 = vunpack.c.h.b16 %v1068
    %v1157 = vunpack.c.l.b16 %v1069
    %v1158 = vunpack.c.h.b16 %v1069
    %v1159 = vunpack.c.l.b16 %v1070
    %v1160 = vunpack.c.h.b16 %v1070
    %v1161 = vunpack.c.l.b16 %v1071
    %v1162 = vunpack.c.h.b16 %v1071
    %v1163 = vunpack.c.l.b16 %v1072
    %v1164 = vunpack.c.h.b16 %v1072
    %v1165 = vunpack.c.l.b16 %v1073
    %v1166 = vunpack.c.h.b16 %v1073
    %v1167 = vunpack.c.l.b16 %v1074
    %v1168 = vunpack.c.h.b16 %v1074
    %v1169 = vunpack.c.l.b16 %v1075
    %v1170 = vunpack.c.h.b16 %v1075
    %v1171 = vunpack.c.l.b16 %v1076
    %v1172 = vunpack.c.h.b16 %v1076
    %v1173 = vunpack.c.l.b16 %v1077
    %v1174 = vunpack.c.h.b16 %v1077
    %v1175 = vunpack.c.l.b16 %v1078
    %v1176 = vunpack.c.h.b16 %v1078
    %v1177 = vunpack.c.l.b16 %v1079
    %v1178 = vunpack.c.h.b16 %v1079
    %v1179 = vunpack.c.l.b16 %v1080
    %v1180 = vunpack.c.h.b16 %v1080
    %v1181 = vunpack.c.l.b16 %v1081
    %v1182 = vunpack.c.h.b16 %v1081
    %v1183 = vunpack.c.l.b16 %v1082
    %v1184 = vunpack.c.h.b16 %v1082
    %v1185 = vunpack.c.l.b16 %v1083
    %v1186 = vunpack.c.h.b16 %v1083
    %v1187 = vunpack.c.l.b16 %v1084
    %v1188 = vunpack.c.h.b16 %v1084
    %v1189 = vunpack.c.l.b16 %v1085
    %v1190 = vunpack.c.h.b16 %v1085
    %v1191 = vunpack.c.l.b16 %v1086
    %v1192 = vunpack.c.h.b16 %v1086
    %v1193 = vunpack.c.l.b16 %v1087
    %v1194 = vunpack.c.h.b16 %v1087
    %v1195 = vunpack.c.l.b16 %v1088
    %v1196 = vunpack.c.h.b16 %v1088
    %v1197 = vpack.c.b16 %v1135, %v1133
    %v1198 = vpack.c.b16 %v1136, %v1134
    %v1199 = vpack.c.b16 %v1139, %v1137
    %v1200 = vpack.c.b16 %v1140, %v1138
    %v1201 = vpack.c.b16 %v1143, %v1141
    %v1202 = vpack.c.b16 %v1144, %v1142
    %v1203 = vpack.c.b16 %v1147, %v1145
    %v1204 = vpack.c.b16 %v1148, %v1146
    %v1205 = vpack.c.b16 %v1151, %v1149
    %v1206 = vpack.c.b16 %v1152, %v1150
    %v1207 = vpack.c.b16 %v1155, %v1153
    %v1208 = vpack.c.b16 %v1156, %v1154
    %v1209 = vpack.c.b16 %v1159, %v1157
    %v1210 = vpack.c.b16 %v1160, %v1158
    %v1211 = vpack.c.b16 %v1163, %v1161
    %v1212 = vpack.c.b16 %v1164, %v1162
    %v1213 = vpack.c.b16 %v1167, %v1165
    %v1214 = vpack.c.b16 %v1168, %v1166
    %v1215 = vpack.c.b16 %v1171, %v1169
    %v1216 = vpack.c.b16 %v1172, %v1170
    %v1217 = vpack.c.b16 %v1175, %v1173
    %v1218 = vpack.c.b16 %v1176, %v1174
    %v1219 = vpack.c.b16 %v1179, %v1177
    %v1220 = vpack.c.b16 %v1180, %v1178
    %v1221 = vpack.c.b16 %v1183, %v1181
    %v1222 = vpack.c.b16 %v1184, %v1182
    %v1223 = vpack.c.b16 %v1187, %v1185
    %v1224 = vpack.c.b16 %v1188, %v1186
    %v1225 = vpack.c.b16 %v1191, %v1189
    %v1226 = vpack.c.b16 %v1192, %v1190
    %v1227 = vpack.c.b16 %v1195, %v1193
    %v1228 = vpack.c.b16 %v1196, %v1194
    %1261 = vmatprep.subr.bf16.mxu0 %v1198
    %1262 = vmatpush1.bf16.msra.mxu0 %v1197
    %1263 = vmatprep.subr.bf16.mxu0 %v1200
    %1264 = vmatpush1.bf16.msra.mxu0 %v1199
    %1265 = vmatprep.subr.bf16.mxu0 %v1202
    %1266 = vmatpush1.bf16.msra.mxu0 %v1201
    %1267 = vmatprep.subr.bf16.mxu0 %v1204
    %1268 = vmatpush1.bf16.msra.mxu0 %v1203
    %1269 = vmatprep.subr.bf16.mxu0 %v1206
    %1270 = vmatpush1.bf16.msra.mxu0 %v1205
    %1271 = vmatprep.subr.bf16.mxu0 %v1208
    %1272 = vmatpush1.bf16.msra.mxu0 %v1207
    %1273 = vmatprep.subr.bf16.mxu0 %v1210
    %1274 = vmatpush1.bf16.msra.mxu0 %v1209
    %1275 = vmatprep.subr.bf16.mxu0 %v1212
    %1276 = vmatpush1.bf16.msra.mxu0 %v1211
    %1277 = vmatprep.subr.bf16.mxu0 %v1214
    %1278 = vmatpush1.bf16.msra.mxu0 %v1213
    %1279 = vmatprep.subr.bf16.mxu0 %v1216
    %1280 = vmatpush1.bf16.msra.mxu0 %v1215
    %1281 = vmatprep.subr.bf16.mxu0 %v1218
    %1282 = vmatpush1.bf16.msra.mxu0 %v1217
    %1283 = vmatprep.subr.bf16.mxu0 %v1220
    %1284 = vmatpush1.bf16.msra.mxu0 %v1219
    %1285 = vmatprep.subr.bf16.mxu0 %v1222
    %1286 = vmatpush1.bf16.msra.mxu0 %v1221
    %1287 = vmatprep.subr.bf16.mxu0 %v1224
    %1288 = vmatpush1.bf16.msra.mxu0 %v1223
    %1289 = vmatprep.subr.bf16.mxu0 %v1226
    %1290 = vmatpush1.bf16.msra.mxu0 %v1225
    %1291 = vmatprep.subr.bf16.mxu0 %v1228
    %1292 = vmatpush1.bf16.msra.mxu0 %v1227
    %1293 = vmatprep.mubr.bf16.mxu0 %v1056
    %1294 = vmatmul.mubr.bf16.gmra.mrb[0].mxu0 %v1055
    %v1295 = vpop.f32.mrb[0].mxu0
    %v1296 = vadd.f32 %v1094, %v1295
    %v1297 = vpop.f32.mrb[0].mxu0
    %v1298 = vadd.f32 %v1098, %v1297
    %v1299 = vpop.f32.mrb[0].mxu0
    %v1300 = vpop.f32.mrb[0].mxu0
    %1301 = vdwg.mxu0
    %vm1302 = vcmp.gt.f32.partialorder %v1296, 0.0
    %vm1303 = vcmp.gt.f32.partialorder %v1298, 0.0
    %v1304 = vmul.f32 %v1296, 0.2
    %v1305 = vmul.f32 %v1298, 0.2
    %v1306 = vsel %vm1302, %v1296, %v1304
    %v1307 = vsel %vm1303, %v1298, %v1305
    %v1308 = vpack.c.bf16 %v1306, %v1306
    %v1309 = vpack.c.bf16 %v1307, %v1307
    %v1310 = vld [vmem:[#allocation13] sm:$0xf]
    %v1311 = vld [vmem:[#allocation13 + $0x4] sm:$0xf]
    %v1312 = vld [vmem:[#allocation13 + $0x8] sm:$0xf]
    %v1313 = vld [vmem:[#allocation13 + $0xc] sm:$0xf]
    %v1314 = vld [vmem:[#allocation13 + $0x10] sm:$0xf]
    %v1315 = vld [vmem:[#allocation13 + $0x14] sm:$0xf]
    %v1316 = vld [vmem:[#allocation13 + $0x18] sm:$0xf]
    %v1317 = vld [vmem:[#allocation13 + $0x1c] sm:$0xf]
    %v1318 = vld [vmem:[#allocation13 + $0x20] sm:$0xf]
    %v1319 = vld [vmem:[#allocation13 + $0x24] sm:$0xf]
    %v1320 = vld [vmem:[#allocation13 + $0x28] sm:$0xf]
    %v1321 = vld [vmem:[#allocation13 + $0x2c] sm:$0xf]
    %v1322 = vld [vmem:[#allocation13 + $0x30] sm:$0xf]
    %v1323 = vld [vmem:[#allocation13 + $0x34] sm:$0xf]
    %v1324 = vld [vmem:[#allocation13 + $0x38] sm:$0xf]
    %v1325 = vld [vmem:[#allocation13 + $0x3c] sm:$0xf]
    %v1326 = vld [vmem:[#allocation13 + $0x40] sm:$0xf]
    %v1327 = vld [vmem:[#allocation13 + $0x44] sm:$0xf]
    %v1328 = vld [vmem:[#allocation13 + $0x48] sm:$0xf]
    %v1329 = vld [vmem:[#allocation13 + $0x4c] sm:$0xf]
    %v1330 = vld [vmem:[#allocation13 + $0x50] sm:$0xf]
    %v1331 = vld [vmem:[#allocation13 + $0x54] sm:$0xf]
    %v1332 = vld [vmem:[#allocation13 + $0x58] sm:$0xf]
    %v1333 = vld [vmem:[#allocation13 + $0x5c] sm:$0xf]
    %v1334 = vld [vmem:[#allocation13 + $0x60] sm:$0xf]
    %v1335 = vld [vmem:[#allocation13 + $0x64] sm:$0xf]
    %v1336 = vld [vmem:[#allocation13 + $0x68] sm:$0xf]
    %v1337 = vld [vmem:[#allocation13 + $0x6c] sm:$0xf]
    %v1338 = vld [vmem:[#allocation13 + $0x70] sm:$0xf]
    %v1339 = vld [vmem:[#allocation13 + $0x74] sm:$0xf]
    %v1340 = vld [vmem:[#allocation13 + $0x78] sm:$0xf]
    %v1341 = vld [vmem:[#allocation13 + $0x7c] sm:$0xf]
    %v1342 = vld [vmem:[%s12] sm:$0x1]
    %v1344 = vlaneseq
    %v1345 = vshrl.u32 %v1344, 7
    %v1346 = vsub.s32 0, %v1345
    %v1347 = vrot.slane %v1342, %v1346
    %v1381 = vunpack.c.l.b16 %v1310
    %v1382 = vunpack.c.l.b16 %v1311
    %v1383 = vunpack.c.l.b16 %v1312
    %v1384 = vunpack.c.l.b16 %v1313
    %v1385 = vunpack.c.l.b16 %v1314
    %v1386 = vunpack.c.l.b16 %v1315
    %v1387 = vunpack.c.l.b16 %v1316
    %v1388 = vunpack.c.l.b16 %v1317
    %v1389 = vunpack.c.l.b16 %v1318
    %v1390 = vunpack.c.l.b16 %v1319
    %v1391 = vunpack.c.l.b16 %v1320
    %v1392 = vunpack.c.l.b16 %v1321
    %v1393 = vunpack.c.l.b16 %v1322
    %v1394 = vunpack.c.l.b16 %v1323
    %v1395 = vunpack.c.l.b16 %v1324
    %v1396 = vunpack.c.l.b16 %v1325
    %v1397 = vunpack.c.l.b16 %v1326
    %v1398 = vunpack.c.l.b16 %v1327
    %v1399 = vunpack.c.l.b16 %v1328
    %v1400 = vunpack.c.l.b16 %v1329
    %v1401 = vunpack.c.l.b16 %v1330
    %v1402 = vunpack.c.l.b16 %v1331
    %v1403 = vunpack.c.l.b16 %v1332
    %v1404 = vunpack.c.l.b16 %v1333
    %v1405 = vunpack.c.l.b16 %v1334
    %v1406 = vunpack.c.l.b16 %v1335
    %v1407 = vunpack.c.l.b16 %v1336
    %v1408 = vunpack.c.l.b16 %v1337
    %v1409 = vunpack.c.l.b16 %v1338
    %v1410 = vunpack.c.l.b16 %v1339
    %v1411 = vunpack.c.l.b16 %v1340
    %v1412 = vunpack.c.l.b16 %v1341
    %v1413 = vpack.c.b16 %v1382, %v1381
    %v1414 = vpack.c.b16 %v1384, %v1383
    %v1415 = vpack.c.b16 %v1386, %v1385
    %v1416 = vpack.c.b16 %v1388, %v1387
    %v1417 = vpack.c.b16 %v1390, %v1389
    %v1418 = vpack.c.b16 %v1392, %v1391
    %v1419 = vpack.c.b16 %v1394, %v1393
    %v1420 = vpack.c.b16 %v1396, %v1395
    %v1421 = vpack.c.b16 %v1398, %v1397
    %v1422 = vpack.c.b16 %v1400, %v1399
    %v1423 = vpack.c.b16 %v1402, %v1401
    %v1424 = vpack.c.b16 %v1404, %v1403
    %v1425 = vpack.c.b16 %v1406, %v1405
    %v1426 = vpack.c.b16 %v1408, %v1407
    %v1427 = vpack.c.b16 %v1410, %v1409
    %v1428 = vpack.c.b16 %v1412, %v1411
    %1445 = vmatprep.subr.bf16.mxu0 0
    %1446 = vmatpush1.bf16.msra.mxu0 %v1413
    %1447 = vmatprep.subr.bf16.mxu0 0
    %1448 = vmatpush1.bf16.msra.mxu0 %v1414
    %1449 = vmatprep.subr.bf16.mxu0 0
    %1450 = vmatpush1.bf16.msra.mxu0 %v1415
    %1451 = vmatprep.subr.bf16.mxu0 0
    %1452 = vmatpush1.bf16.msra.mxu0 %v1416
    %1453 = vmatprep.subr.bf16.mxu0 0
    %1454 = vmatpush1.bf16.msra.mxu0 %v1417
    %1455 = vmatprep.subr.bf16.mxu0 0
    %1456 = vmatpush1.bf16.msra.mxu0 %v1418
    %1457 = vmatprep.subr.bf16.mxu0 0
    %1458 = vmatpush1.bf16.msra.mxu0 %v1419
    %1459 = vmatprep.subr.bf16.mxu0 0
    %1460 = vmatpush1.bf16.msra.mxu0 %v1420
    %1461 = vmatprep.subr.bf16.mxu0 0
    %1462 = vmatpush1.bf16.msra.mxu0 %v1421
    %1463 = vmatprep.subr.bf16.mxu0 0
    %1464 = vmatpush1.bf16.msra.mxu0 %v1422
    %1465 = vmatprep.subr.bf16.mxu0 0
    %1466 = vmatpush1.bf16.msra.mxu0 %v1423
    %1467 = vmatprep.subr.bf16.mxu0 0
    %1468 = vmatpush1.bf16.msra.mxu0 %v1424
    %1469 = vmatprep.subr.bf16.mxu0 0
    %1470 = vmatpush1.bf16.msra.mxu0 %v1425
    %1471 = vmatprep.subr.bf16.mxu0 0
    %1472 = vmatpush1.bf16.msra.mxu0 %v1426
    %1473 = vmatprep.subr.bf16.mxu0 0
    %1474 = vmatpush1.bf16.msra.mxu0 %v1427
    %1475 = vmatprep.subr.bf16.mxu0 0
    %1476 = vmatpush1.bf16.msra.mxu0 %v1428
    %1477 = vmatprep.mubr.bf16.mxu0 %v1309
    %1478 = vmatmul.mubr.bf16.gmra.mrb[0].mxu0 %v1308
    %v1479 = vpop.f32.mrb[0].mxu0
    %v1480 = vadd.f32 %v1347, %v1479
    %v1481 = vpop.f32.mrb[0].mxu0
    %v1482 = vpop.f32.mrb[0].mxu0
    %v1483 = vpop.f32.mrb[0].mxu0
    %1484 = vdwg.mxu0
    %1485 = vst [vmem:[#allocation14] sm:$0xff] %v1480
    // Predicated region
    $region82: #{tpu_custom_call.1} parent=1 // pred_check
      _
    $region83: #{tpu_custom_call.1} parent=1 // pred_check_branch
      %1487 = sbr.rel (0) target = $region85
    $region84: #{tpu_custom_call.1} parent=1 // pred_region
      %s1489 = ssub.s32 128, 128
      %1490 = vsyncadd [#allocation4], %s1489
      %s1492 = sshll.u32 [#allocation14], 4
      %s1493 = int_to_ptr.vmem [resolvable:$true] %s1492
      %1495 = dma.vmem_to_hbm [thread:$0]  %s1493, 128, %s13, [#allocation4]
    $region85: #{tpu_custom_call.1} parent=1 // pred_fallthru
      _
    // Predicated region
    $region86: #{tpu_custom_call.1} parent=1 // pred_check
      _
    $region87: #{tpu_custom_call.1} parent=1 // pred_check_branch
      %1497 = sbr.rel (0) target = $region89
    $region88: #{tpu_custom_call.1} parent=1 // pred_region
      %1498 = dma.done [#allocation4], 128
    $region89: #{tpu_custom_call.1} parent=1 // pred_fallthru
      _
    %1499 = vsyncpa [#allocation3], 1
    %1500 = vsyncpa [#allocation6], 1
    %1501 = vsyncpa [#allocation9], 1
    %1502 = vsyncpa [#allocation12], 1
    %1503 = vsyncpa [#allocation4], 1

</llo_original>
